<compile_context>
chip_gen: v6e
topology: v6e:2x2x1
jax: 0.10.0
libtpu: 0.0.40
codegen_flags: <defaults>
</compile_context>

<pallas_src>
import jax
import jax.numpy as jnp
from jax.experimental import pallas as pl
from jax.experimental.pallas import tpu as pltpu

C_OUT = 10
KH = KW = 3

C_SPLIT = 2                  # channel groups -> >= 2 parallel grid steps (v7x megacore)
C_GRP = C_OUT // C_SPLIT     # 5 output channels per grid step
LANE_DENSE_MIN_N = 32        # switch to batch-on-lanes layout at this batch size
LANE_TILE = 128              # images per grid step (on lanes) in lane-dense path
VMEM_LIMIT_BYTES = 32 * 1024 * 1024   # raise v5e's 16 MiB default; == v6e/v7x default


# ----------------------------------------------------------------------------
# Kernels
# ----------------------------------------------------------------------------
def _conv_relu_packed_kernel(x_ref, w_ref, b_ref, o_ref):
    """Small-batch path: P = 128 // W images packed side by side on lanes.

    Grid: (C_SPLIT,) -- one group of C_GRP output channels per grid step.
      x_ref : (GB, H, P*W)                      VMEM
      w_ref : (C_OUT * KH * KW,)                SMEM (flattened OIHW, I == 1)
      b_ref : (C_OUT,)                          SMEM
      o_ref : (GB, C_GRP, H_out, P*W - KW + 1)  VMEM
    """
    c_grp = o_ref.shape[1]
    h_out = o_ref.shape[2]
    pw_out = o_ref.shape[3]
    co_base = pl.program_id(0) * c_grp

    x = x_ref[...]  # (GB, H, PW)
    # 9 statically shifted views of the whole packed block, computed once per
    # grid step and reused for all C_GRP channels (shift-and-accumulate conv;
    # no im2col / MXU).  The dj lane shifts never cross an image boundary for
    # the output columns we keep, because dj + w_out <= W.
    patches = [x[:, di:di + h_out, dj:dj + pw_out]
               for di in range(KH) for dj in range(KW)]

    for cl in range(c_grp):
        co = co_base + cl                                   # dynamic SMEM index
        acc = jnp.full(patches[0].shape, b_ref[co], dtype=jnp.float32)
        for t in range(KH * KW):
            acc = acc + patches[t] * w_ref[co * (KH * KW) + t]
        # ReLU + single store per output channel.
        o_ref[:, cl, :, :] = jnp.maximum(acc, 0.0).astype(o_ref.dtype)


def _conv_relu_lane_kernel(x_ref, w_ref, b_ref, o_ref):
    """Lane-dense path: the batch sits on the 128-wide lane axis.

    Grid: (N_tiles, C_SPLIT).
      x_ref : (H, W, NT)                    VMEM
      w_ref : (C_OUT * KH * KW,)            SMEM
      b_ref : (C_OUT,)                      SMEM
      o_ref : (C_GRP, H_out, W_out, NT)     VMEM   (NT = 128 -> unmasked stores)
    """
    c_grp, h_out, w_out, nt = o_ref.shape
    co_base = pl.program_id(1) * c_grp

    x = x_ref[...]  # (H, W, NT)
    patches = [x[di:di + h_out, dj:dj + w_out, :]
               for di in range(KH) for dj in range(KW)]

    for cl in range(c_grp):
        co = co_base + cl
        acc = jnp.full((h_out, w_out, nt), b_ref[co], dtype=jnp.float32)
        for t in range(KH * KW):
            acc = acc + patches[t] * w_ref[co * (KH * KW) + t]
        o_ref[cl] = jnp.maximum(acc, 0.0).astype(o_ref.dtype)


# ----------------------------------------------------------------------------
# Wrappers
# ----------------------------------------------------------------------------
def _cost_estimate(n, h, w, h_out, w_out):
    return pl.CostEstimate(
        flops=2 * n * C_OUT * h_out * w_out * KH * KW,
        transcendentals=0,
        bytes_accessed=4 * (n * h * w
                            + n * C_OUT * h_out * w_out
                            + C_OUT * KH * KW + C_OUT),
    )


def _conv_relu_packed(x_img, w_flat, b):
    """x_img: (N, H, W) -> (N, C_OUT, H_out, W_out).  Small-N (N < 32) path."""
    N, H, W = x_img.shape
    h_out, w_out = H - KH + 1, W - KW + 1

    p = max(1, 128 // W)          # images packed per lane row (4 for W=28)
    pw = p * W
    pw_out = pw - KW + 1
    n_pad = pl.cdiv(N, p) * p
    gb = n_pad // p
    if n_pad != N:
        x_img = jnp.pad(x_img, ((0, n_pad - N), (0, 0), (0, 0)))
    # (n_pad, H, W) -> (gb, H, P*W): P images share each (sublane x lane) row.
    x_packed = (x_img.reshape(gb, p, H, W)
                     .transpose(0, 2, 1, 3)
                     .reshape(gb, H, pw))

    out_packed = pl.pallas_call(
        _conv_relu_packed_kernel,
        out_shape=jax.ShapeDtypeStruct((gb, C_OUT, h_out, pw_out), jnp.float32),
        grid_spec=pltpu.PrefetchScalarGridSpec(
            num_scalar_prefetch=0,
            grid=(C_SPLIT,),
            in_specs=[
                pl.BlockSpec((gb, H, pw), lambda c: (0, 0, 0)),
                pl.BlockSpec(memory_space=pltpu.MemorySpace.SMEM),
                pl.BlockSpec(memory_space=pltpu.MemorySpace.SMEM),
            ],
            out_specs=pl.BlockSpec((gb, C_GRP, h_out, pw_out),
                                   lambda c: (0, c, 0, 0)),
        ),
        compiler_params=pltpu.CompilerParams(
            dimension_semantics=("parallel",),
            vmem_limit_bytes=VMEM_LIMIT_BYTES),
        cost_estimate=_cost_estimate(n_pad, H, W, h_out, w_out),
    )(x_packed, w_flat, b)

    # Un-pack lanes back to NCHW (small data; plain XLA layout plumbing).
    out_packed = jnp.pad(out_packed, ((0, 0), (0, 0), (0, 0), (0, KW - 1)))
    out = out_packed.reshape(gb, C_OUT, h_out, p, W)[..., :w_out]
    out = out.transpose(0, 3, 1, 2, 4).reshape(n_pad, C_OUT, h_out, w_out)
    return out[:N]


def _conv_relu_lane_dense(x_img, w_flat, b):
    """x_img: (N, H, W) -> (N, C_OUT, H_out, W_out), batch on the lane axis."""
    N, H, W = x_img.shape
    h_out, w_out = H - KH + 1, W - KW + 1
    nt = LANE_TILE
    n_pad = pl.cdiv(N, nt) * nt

    x_t = jnp.transpose(x_img, (1, 2, 0))  # (H, W, N): batch -> lanes
    if n_pad != N:
        x_t = jnp.pad(x_t, ((0, 0), (0, 0), (0, n_pad - N)))

    out_t = pl.pallas_call(
        _conv_relu_lane_kernel,
        out_shape=jax.ShapeDtypeStruct((C_OUT, h_out, w_out, n_pad),
                                       jnp.float32),
        grid_spec=pltpu.PrefetchScalarGridSpec(
            num_scalar_prefetch=0,
            grid=(n_pad // nt, C_SPLIT),
            in_specs=[
                pl.BlockSpec((H, W, nt), lambda n, c: (0, 0, n)),
                pl.BlockSpec(memory_space=pltpu.MemorySpace.SMEM),
                pl.BlockSpec(memory_space=pltpu.MemorySpace.SMEM),
            ],
            out_specs=pl.BlockSpec((C_GRP, h_out, w_out, nt),
                                   lambda n, c: (c, 0, 0, n)),
        ),
        compiler_params=pltpu.CompilerParams(
            dimension_semantics=("parallel", "parallel"),
            vmem_limit_bytes=VMEM_LIMIT_BYTES),
        cost_estimate=_cost_estimate(n_pad, H, W, h_out, w_out),
    )(x_t, w_flat, b)

    # TODO(synk): this NCHW transpose is an un-fused HBM round trip; consumers
    # that accept channels-last (C_OUT, H_out, W_out, N) should take out_t.
    return jnp.transpose(out_t[..., :N], (3, 0, 1, 2))


def conv_relu(x_nchw, weight, bias):
    """relu(conv2d(x, weight, bias)), VALID padding, stride 1.

    x_nchw : (N, 1, H, W) float32
    weight : (C_OUT, 1, KH, KW) float32  (PyTorch OIHW convention)
    bias   : (C_OUT,) float32
    returns: (N, C_OUT, H-2, W-2) float32
    """
    N, C_in, H, W = x_nchw.shape
    assert C_in == 1, "module is Conv2d(1, 10, 3)"
    x_img = x_nchw[:, 0, :, :].astype(jnp.float32)        # (N, H, W)
    w_flat = weight.reshape(-1).astype(jnp.float32)        # (C_OUT*KH*KW,)
    b = bias.astype(jnp.float32)

    if N >= LANE_DENSE_MIN_N:
        return _conv_relu_lane_dense(x_img, w_flat, b)
    return _conv_relu_packed(x_img, w_flat, b)


# ----------------------------------------------------------------------------
# Self-test
# ----------------------------------------------------------------------------
if __name__ == "__main__":
    key = jax.random.PRNGKey(0)
    kx, kw, kb = jax.random.split(key, 3)

    H = W = 28  # FashionMNIST-style spatial size

    # Deterministic init mimicking PyTorch Conv2d default (uniform +-1/sqrt(fan_in))
    fan_in = 1 * KH * KW
    bound = 1.0 / (fan_in ** 0.5)
    weight = jax.random.uniform(kw, (C_OUT, 1, KH, KW), jnp.float32, -bound, bound)
    bias = jax.random.uniform(kb, (C_OUT,), jnp.float32, -bound, bound)

    def reference(x):
        r = jax.lax.conv_general_dilated(
            x, weight, window_strides=(1, 1), padding="VALID",
            dimension_numbers=("NCHW", "OIHW", "NCHW"))
        return jnp.maximum(r + bias[None, :, None, None], 0.0)

    # 1) Primary small-shape example: batch = 2 (packed-lanes path).
    N = 2
    x = jax.random.normal(kx, (N, 1, H, W), dtype=jnp.float32)
    out = jax.block_until_ready(conv_relu(x, weight, bias))
    assert out.shape == (N, C_OUT, H - 2, W - 2)
    assert jnp.allclose(out, reference(x), atol=1e-5, rtol=1e-5)

    # 2) Odd batch (13): packed path with batch padding across lane groups.
    x2 = jax.random.normal(jax.random.PRNGKey(1), (13, 1, H, W), jnp.float32)
    out2 = jax.block_until_ready(conv_relu(x2, weight, bias))
    assert jnp.allclose(out2, reference(x2), atol=1e-5, rtol=1e-5)

    # 3) Medium batch (48): lane-dense path, single padded 128-lane tile.
    x3 = jax.random.normal(jax.random.PRNGKey(2), (48, 1, H, W), jnp.float32)
    out3 = jax.block_until_ready(conv_relu(x3, weight, bias))
    assert jnp.allclose(out3, reference(x3), atol=1e-5, rtol=1e-5)

    # 4) Larger batch (130): lane-dense path with two lane tiles.
    x4 = jax.random.normal(jax.random.PRNGKey(3), (130, 1, H, W), jnp.float32)
    out4 = jax.block_until_ready(conv_relu(x4, weight, bias))
    assert jnp.allclose(out4, reference(x4), atol=1e-5, rtol=1e-5)

    print("KERNEL_OK")
</pallas_src>

<mosaic_0001>
module attributes {stable_mosaic.version = 11 : i64} {
  func.func @_conv_relu_packed_kernel(%arg0: i32, %arg1: memref<1x28x112xf32, #tpu.memory_space<vmem>>, %arg2: memref<90xf32, #tpu.memory_space<smem>>, %arg3: memref<10xf32, #tpu.memory_space<smem>>, %arg4: memref<1x5x26x110xf32, #tpu.memory_space<vmem>>) attributes {dimension_semantics = [#tpu.dimension_semantics<parallel>], iteration_bounds = array<i64: 2>, scalar_prefetch = 0 : i64, scratch_operands = 0 : i64, tpu.core_type = #tpu.core_type<tc>, window_params = [{pipeline_mode = #tpu.pipeline_mode<synchronous>, transform_indices = @transform_0, window_bounds = array<i64: 1, 28, 112>}, {transform_indices = @transform_1, window_bounds = array<i64: 90>}, {transform_indices = @transform_2, window_bounds = array<i64: 10>}, {transform_indices = @transform_3, window_bounds = array<i64: 1, 5, 26, 110>}]} {
    %c5_i32 = arith.constant 5 : i32
    %0 = arith.muli %arg0, %c5_i32 : i32
    %c0 = arith.constant 0 : index
    %c0_0 = arith.constant 0 : index
    %c0_1 = arith.constant 0 : index
    %1 = vector.load %arg1[%c0, %c0_0, %c0_1] : memref<1x28x112xf32, #tpu.memory_space<vmem>>, vector<1x28x112xf32>
    %2 = vector.extract_strided_slice %1 {offsets = [0, 0, 0], sizes = [1, 26, 110], strides = [1, 1, 1]} : vector<1x28x112xf32> to vector<1x26x110xf32>
    %3 = vector.extract_strided_slice %1 {offsets = [0, 0, 1], sizes = [1, 26, 110], strides = [1, 1, 1]} : vector<1x28x112xf32> to vector<1x26x110xf32>
    %4 = vector.extract_strided_slice %1 {offsets = [0, 0, 2], sizes = [1, 26, 110], strides = [1, 1, 1]} : vector<1x28x112xf32> to vector<1x26x110xf32>
    %5 = vector.extract_strided_slice %1 {offsets = [0, 1, 0], sizes = [1, 26, 110], strides = [1, 1, 1]} : vector<1x28x112xf32> to vector<1x26x110xf32>
    %6 = vector.extract_strided_slice %1 {offsets = [0, 1, 1], sizes = [1, 26, 110], strides = [1, 1, 1]} : vector<1x28x112xf32> to vector<1x26x110xf32>
    %7 = vector.extract_strided_slice %1 {offsets = [0, 1, 2], sizes = [1, 26, 110], strides = [1, 1, 1]} : vector<1x28x112xf32> to vector<1x26x110xf32>
    %8 = vector.extract_strided_slice %1 {offsets = [0, 2, 0], sizes = [1, 26, 110], strides = [1, 1, 1]} : vector<1x28x112xf32> to vector<1x26x110xf32>
    %9 = vector.extract_strided_slice %1 {offsets = [0, 2, 1], sizes = [1, 26, 110], strides = [1, 1, 1]} : vector<1x28x112xf32> to vector<1x26x110xf32>
    %10 = vector.extract_strided_slice %1 {offsets = [0, 2, 2], sizes = [1, 26, 110], strides = [1, 1, 1]} : vector<1x28x112xf32> to vector<1x26x110xf32>
    %c0_i32 = arith.constant 0 : i32
    %11 = arith.addi %0, %c0_i32 : i32
    %12 = arith.index_cast %11 : i32 to index
    %13 = memref.load %arg3[%12] : memref<10xf32, #tpu.memory_space<smem>>
    %14 = vector.broadcast %13 : f32 to vector<1x26x110xf32>
    %c9_i32 = arith.constant 9 : i32
    %15 = arith.muli %11, %c9_i32 : i32
    %c0_i32_2 = arith.constant 0 : i32
    %16 = arith.addi %15, %c0_i32_2 : i32
    %17 = arith.index_cast %16 : i32 to index
    %18 = memref.load %arg2[%17] : memref<90xf32, #tpu.memory_space<smem>>
    %19 = vector.broadcast %18 : f32 to vector<1x26x110xf32>
    %20 = arith.mulf %2, %19 : vector<1x26x110xf32>
    %21 = arith.addf %14, %20 : vector<1x26x110xf32>
    %c9_i32_3 = arith.constant 9 : i32
    %22 = arith.muli %11, %c9_i32_3 : i32
    %c1_i32 = arith.constant 1 : i32
    %23 = arith.addi %22, %c1_i32 : i32
    %24 = arith.index_cast %23 : i32 to index
    %25 = memref.load %arg2[%24] : memref<90xf32, #tpu.memory_space<smem>>
    %26 = vector.broadcast %25 : f32 to vector<1x26x110xf32>
    %27 = arith.mulf %3, %26 : vector<1x26x110xf32>
    %28 = arith.addf %21, %27 : vector<1x26x110xf32>
    %c9_i32_4 = arith.constant 9 : i32
    %29 = arith.muli %11, %c9_i32_4 : i32
    %c2_i32 = arith.constant 2 : i32
    %30 = arith.addi %29, %c2_i32 : i32
    %31 = arith.index_cast %30 : i32 to index
    %32 = memref.load %arg2[%31] : memref<90xf32, #tpu.memory_space<smem>>
    %33 = vector.broadcast %32 : f32 to vector<1x26x110xf32>
    %34 = arith.mulf %4, %33 : vector<1x26x110xf32>
    %35 = arith.addf %28, %34 : vector<1x26x110xf32>
    %c9_i32_5 = arith.constant 9 : i32
    %36 = arith.muli %11, %c9_i32_5 : i32
    %c3_i32 = arith.constant 3 : i32
    %37 = arith.addi %36, %c3_i32 : i32
    %38 = arith.index_cast %37 : i32 to index
    %39 = memref.load %arg2[%38] : memref<90xf32, #tpu.memory_space<smem>>
    %40 = vector.broadcast %39 : f32 to vector<1x26x110xf32>
    %41 = arith.mulf %5, %40 : vector<1x26x110xf32>
    %42 = arith.addf %35, %41 : vector<1x26x110xf32>
    %c9_i32_6 = arith.constant 9 : i32
    %43 = arith.muli %11, %c9_i32_6 : i32
    %c4_i32 = arith.constant 4 : i32
    %44 = arith.addi %43, %c4_i32 : i32
    %45 = arith.index_cast %44 : i32 to index
    %46 = memref.load %arg2[%45] : memref<90xf32, #tpu.memory_space<smem>>
    %47 = vector.broadcast %46 : f32 to vector<1x26x110xf32>
    %48 = arith.mulf %6, %47 : vector<1x26x110xf32>
    %49 = arith.addf %42, %48 : vector<1x26x110xf32>
    %c9_i32_7 = arith.constant 9 : i32
    %50 = arith.muli %11, %c9_i32_7 : i32
    %c5_i32_8 = arith.constant 5 : i32
    %51 = arith.addi %50, %c5_i32_8 : i32
    %52 = arith.index_cast %51 : i32 to index
    %53 = memref.load %arg2[%52] : memref<90xf32, #tpu.memory_space<smem>>
    %54 = vector.broadcast %53 : f32 to vector<1x26x110xf32>
    %55 = arith.mulf %7, %54 : vector<1x26x110xf32>
    %56 = arith.addf %49, %55 : vector<1x26x110xf32>
    %c9_i32_9 = arith.constant 9 : i32
    %57 = arith.muli %11, %c9_i32_9 : i32
    %c6_i32 = arith.constant 6 : i32
    %58 = arith.addi %57, %c6_i32 : i32
    %59 = arith.index_cast %58 : i32 to index
    %60 = memref.load %arg2[%59] : memref<90xf32, #tpu.memory_space<smem>>
    %61 = vector.broadcast %60 : f32 to vector<1x26x110xf32>
    %62 = arith.mulf %8, %61 : vector<1x26x110xf32>
    %63 = arith.addf %56, %62 : vector<1x26x110xf32>
    %c9_i32_10 = arith.constant 9 : i32
    %64 = arith.muli %11, %c9_i32_10 : i32
    %c7_i32 = arith.constant 7 : i32
    %65 = arith.addi %64, %c7_i32 : i32
    %66 = arith.index_cast %65 : i32 to index
    %67 = memref.load %arg2[%66] : memref<90xf32, #tpu.memory_space<smem>>
    %68 = vector.broadcast %67 : f32 to vector<1x26x110xf32>
    %69 = arith.mulf %9, %68 : vector<1x26x110xf32>
    %70 = arith.addf %63, %69 : vector<1x26x110xf32>
    %c9_i32_11 = arith.constant 9 : i32
    %71 = arith.muli %11, %c9_i32_11 : i32
    %c8_i32 = arith.constant 8 : i32
    %72 = arith.addi %71, %c8_i32 : i32
    %73 = arith.index_cast %72 : i32 to index
    %74 = memref.load %arg2[%73] : memref<90xf32, #tpu.memory_space<smem>>
    %75 = vector.broadcast %74 : f32 to vector<1x26x110xf32>
    %76 = arith.mulf %10, %75 : vector<1x26x110xf32>
    %77 = arith.addf %70, %76 : vector<1x26x110xf32>
    %cst = arith.constant 0.000000e+00 : f32
    %78 = vector.broadcast %cst : f32 to vector<1x26x110xf32>
    %79 = arith.maximumf %77, %78 : vector<1x26x110xf32>
    %c0_12 = arith.constant 0 : index
    %c0_13 = arith.constant 0 : index
    %c0_14 = arith.constant 0 : index
    %c0_15 = arith.constant 0 : index
    %80 = vector.load %arg4[%c0_12, %c0_13, %c0_14, %c0_15] : memref<1x5x26x110xf32, #tpu.memory_space<vmem>>, vector<1x1x26x110xf32>
    %81 = vector.shape_cast %80 : vector<1x1x26x110xf32> to vector<1x26x110xf32>
    %82 = vector.shape_cast %79 : vector<1x26x110xf32> to vector<1x1x26x110xf32>
    tpu.vector_store %arg4[%c0_12, %c0_13, %c0_14, %c0_15], %82 {strides = array<i32>} : memref<1x5x26x110xf32, #tpu.memory_space<vmem>>, vector<1x1x26x110xf32>,
    %c1_i32_16 = arith.constant 1 : i32
    %83 = arith.addi %0, %c1_i32_16 : i32
    %84 = arith.index_cast %83 : i32 to index
    %85 = memref.load %arg3[%84] : memref<10xf32, #tpu.memory_space<smem>>
    %86 = vector.broadcast %85 : f32 to vector<1x26x110xf32>
    %c9_i32_17 = arith.constant 9 : i32
    %87 = arith.muli %83, %c9_i32_17 : i32
    %c0_i32_18 = arith.constant 0 : i32
    %88 = arith.addi %87, %c0_i32_18 : i32
    %89 = arith.index_cast %88 : i32 to index
    %90 = memref.load %arg2[%89] : memref<90xf32, #tpu.memory_space<smem>>
    %91 = vector.broadcast %90 : f32 to vector<1x26x110xf32>
    %92 = arith.mulf %2, %91 : vector<1x26x110xf32>
    %93 = arith.addf %86, %92 : vector<1x26x110xf32>
    %c9_i32_19 = arith.constant 9 : i32
    %94 = arith.muli %83, %c9_i32_19 : i32
    %c1_i32_20 = arith.constant 1 : i32
    %95 = arith.addi %94, %c1_i32_20 : i32
    %96 = arith.index_cast %95 : i32 to index
    %97 = memref.load %arg2[%96] : memref<90xf32, #tpu.memory_space<smem>>
    %98 = vector.broadcast %97 : f32 to vector<1x26x110xf32>
    %99 = arith.mulf %3, %98 : vector<1x26x110xf32>
    %100 = arith.addf %93, %99 : vector<1x26x110xf32>
    %c9_i32_21 = arith.constant 9 : i32
    %101 = arith.muli %83, %c9_i32_21 : i32
    %c2_i32_22 = arith.constant 2 : i32
    %102 = arith.addi %101, %c2_i32_22 : i32
    %103 = arith.index_cast %102 : i32 to index
    %104 = memref.load %arg2[%103] : memref<90xf32, #tpu.memory_space<smem>>
    %105 = vector.broadcast %104 : f32 to vector<1x26x110xf32>
    %106 = arith.mulf %4, %105 : vector<1x26x110xf32>
    %107 = arith.addf %100, %106 : vector<1x26x110xf32>
    %c9_i32_23 = arith.constant 9 : i32
    %108 = arith.muli %83, %c9_i32_23 : i32
    %c3_i32_24 = arith.constant 3 : i32
    %109 = arith.addi %108, %c3_i32_24 : i32
    %110 = arith.index_cast %109 : i32 to index
    %111 = memref.load %arg2[%110] : memref<90xf32, #tpu.memory_space<smem>>
    %112 = vector.broadcast %111 : f32 to vector<1x26x110xf32>
    %113 = arith.mulf %5, %112 : vector<1x26x110xf32>
    %114 = arith.addf %107, %113 : vector<1x26x110xf32>
    %c9_i32_25 = arith.constant 9 : i32
    %115 = arith.muli %83, %c9_i32_25 : i32
    %c4_i32_26 = arith.constant 4 : i32
    %116 = arith.addi %115, %c4_i32_26 : i32
    %117 = arith.index_cast %116 : i32 to index
    %118 = memref.load %arg2[%117] : memref<90xf32, #tpu.memory_space<smem>>
    %119 = vector.broadcast %118 : f32 to vector<1x26x110xf32>
    %120 = arith.mulf %6, %119 : vector<1x26x110xf32>
    %121 = arith.addf %114, %120 : vector<1x26x110xf32>
    %c9_i32_27 = arith.constant 9 : i32
    %122 = arith.muli %83, %c9_i32_27 : i32
    %c5_i32_28 = arith.constant 5 : i32
    %123 = arith.addi %122, %c5_i32_28 : i32
    %124 = arith.index_cast %123 : i32 to index
    %125 = memref.load %arg2[%124] : memref<90xf32, #tpu.memory_space<smem>>
    %126 = vector.broadcast %125 : f32 to vector<1x26x110xf32>
    %127 = arith.mulf %7, %126 : vector<1x26x110xf32>
    %128 = arith.addf %121, %127 : vector<1x26x110xf32>
    %c9_i32_29 = arith.constant 9 : i32
    %129 = arith.muli %83, %c9_i32_29 : i32
    %c6_i32_30 = arith.constant 6 : i32
    %130 = arith.addi %129, %c6_i32_30 : i32
    %131 = arith.index_cast %130 : i32 to index
    %132 = memref.load %arg2[%131] : memref<90xf32, #tpu.memory_space<smem>>
    %133 = vector.broadcast %132 : f32 to vector<1x26x110xf32>
    %134 = arith.mulf %8, %133 : vector<1x26x110xf32>
    %135 = arith.addf %128, %134 : vector<1x26x110xf32>
    %c9_i32_31 = arith.constant 9 : i32
    %136 = arith.muli %83, %c9_i32_31 : i32
    %c7_i32_32 = arith.constant 7 : i32
    %137 = arith.addi %136, %c7_i32_32 : i32
    %138 = arith.index_cast %137 : i32 to index
    %139 = memref.load %arg2[%138] : memref<90xf32, #tpu.memory_space<smem>>
    %140 = vector.broadcast %139 : f32 to vector<1x26x110xf32>
    %141 = arith.mulf %9, %140 : vector<1x26x110xf32>
    %142 = arith.addf %135, %141 : vector<1x26x110xf32>
    %c9_i32_33 = arith.constant 9 : i32
    %143 = arith.muli %83, %c9_i32_33 : i32
    %c8_i32_34 = arith.constant 8 : i32
    %144 = arith.addi %143, %c8_i32_34 : i32
    %145 = arith.index_cast %144 : i32 to index
    %146 = memref.load %arg2[%145] : memref<90xf32, #tpu.memory_space<smem>>
    %147 = vector.broadcast %146 : f32 to vector<1x26x110xf32>
    %148 = arith.mulf %10, %147 : vector<1x26x110xf32>
    %149 = arith.addf %142, %148 : vector<1x26x110xf32>
    %cst_35 = arith.constant 0.000000e+00 : f32
    %150 = vector.broadcast %cst_35 : f32 to vector<1x26x110xf32>
    %151 = arith.maximumf %149, %150 : vector<1x26x110xf32>
    %c0_36 = arith.constant 0 : index
    %c1 = arith.constant 1 : index
    %c0_37 = arith.constant 0 : index
    %c0_38 = arith.constant 0 : index
    %152 = vector.load %arg4[%c0_36, %c1, %c0_37, %c0_38] : memref<1x5x26x110xf32, #tpu.memory_space<vmem>>, vector<1x1x26x110xf32>
    %153 = vector.shape_cast %152 : vector<1x1x26x110xf32> to vector<1x26x110xf32>
    %154 = vector.shape_cast %151 : vector<1x26x110xf32> to vector<1x1x26x110xf32>
    tpu.vector_store %arg4[%c0_36, %c1, %c0_37, %c0_38], %154 {strides = array<i32>} : memref<1x5x26x110xf32, #tpu.memory_space<vmem>>, vector<1x1x26x110xf32>,
    %c2_i32_39 = arith.constant 2 : i32
    %155 = arith.addi %0, %c2_i32_39 : i32
    %156 = arith.index_cast %155 : i32 to index
    %157 = memref.load %arg3[%156] : memref<10xf32, #tpu.memory_space<smem>>
    %158 = vector.broadcast %157 : f32 to vector<1x26x110xf32>
    %c9_i32_40 = arith.constant 9 : i32
    %159 = arith.muli %155, %c9_i32_40 : i32
    %c0_i32_41 = arith.constant 0 : i32
    %160 = arith.addi %159, %c0_i32_41 : i32
    %161 = arith.index_cast %160 : i32 to index
    %162 = memref.load %arg2[%161] : memref<90xf32, #tpu.memory_space<smem>>
    %163 = vector.broadcast %162 : f32 to vector<1x26x110xf32>
    %164 = arith.mulf %2, %163 : vector<1x26x110xf32>
    %165 = arith.addf %158, %164 : vector<1x26x110xf32>
    %c9_i32_42 = arith.constant 9 : i32
    %166 = arith.muli %155, %c9_i32_42 : i32
    %c1_i32_43 = arith.constant 1 : i32
    %167 = arith.addi %166, %c1_i32_43 : i32
    %168 = arith.index_cast %167 : i32 to index
    %169 = memref.load %arg2[%168] : memref<90xf32, #tpu.memory_space<smem>>
    %170 = vector.broadcast %169 : f32 to vector<1x26x110xf32>
    %171 = arith.mulf %3, %170 : vector<1x26x110xf32>
    %172 = arith.addf %165, %171 : vector<1x26x110xf32>
    %c9_i32_44 = arith.constant 9 : i32
    %173 = arith.muli %155, %c9_i32_44 : i32
    %c2_i32_45 = arith.constant 2 : i32
    %174 = arith.addi %173, %c2_i32_45 : i32
    %175 = arith.index_cast %174 : i32 to index
    %176 = memref.load %arg2[%175] : memref<90xf32, #tpu.memory_space<smem>>
    %177 = vector.broadcast %176 : f32 to vector<1x26x110xf32>
    %178 = arith.mulf %4, %177 : vector<1x26x110xf32>
    %179 = arith.addf %172, %178 : vector<1x26x110xf32>
    %c9_i32_46 = arith.constant 9 : i32
    %180 = arith.muli %155, %c9_i32_46 : i32
    %c3_i32_47 = arith.constant 3 : i32
    %181 = arith.addi %180, %c3_i32_47 : i32
    %182 = arith.index_cast %181 : i32 to index
    %183 = memref.load %arg2[%182] : memref<90xf32, #tpu.memory_space<smem>>
    %184 = vector.broadcast %183 : f32 to vector<1x26x110xf32>
    %185 = arith.mulf %5, %184 : vector<1x26x110xf32>
    %186 = arith.addf %179, %185 : vector<1x26x110xf32>
    %c9_i32_48 = arith.constant 9 : i32
    %187 = arith.muli %155, %c9_i32_48 : i32
    %c4_i32_49 = arith.constant 4 : i32
    %188 = arith.addi %187, %c4_i32_49 : i32
    %189 = arith.index_cast %188 : i32 to index
    %190 = memref.load %arg2[%189] : memref<90xf32, #tpu.memory_space<smem>>
    %191 = vector.broadcast %190 : f32 to vector<1x26x110xf32>
    %192 = arith.mulf %6, %191 : vector<1x26x110xf32>
    %193 = arith.addf %186, %192 : vector<1x26x110xf32>
    %c9_i32_50 = arith.constant 9 : i32
    %194 = arith.muli %155, %c9_i32_50 : i32
    %c5_i32_51 = arith.constant 5 : i32
    %195 = arith.addi %194, %c5_i32_51 : i32
    %196 = arith.index_cast %195 : i32 to index
    %197 = memref.load %arg2[%196] : memref<90xf32, #tpu.memory_space<smem>>
    %198 = vector.broadcast %197 : f32 to vector<1x26x110xf32>
    %199 = arith.mulf %7, %198 : vector<1x26x110xf32>
    %200 = arith.addf %193, %199 : vector<1x26x110xf32>
    %c9_i32_52 = arith.constant 9 : i32
    %201 = arith.muli %155, %c9_i32_52 : i32
    %c6_i32_53 = arith.constant 6 : i32
    %202 = arith.addi %201, %c6_i32_53 : i32
    %203 = arith.index_cast %202 : i32 to index
    %204 = memref.load %arg2[%203] : memref<90xf32, #tpu.memory_space<smem>>
    %205 = vector.broadcast %204 : f32 to vector<1x26x110xf32>
    %206 = arith.mulf %8, %205 : vector<1x26x110xf32>
    %207 = arith.addf %200, %206 : vector<1x26x110xf32>
    %c9_i32_54 = arith.constant 9 : i32
    %208 = arith.muli %155, %c9_i32_54 : i32
    %c7_i32_55 = arith.constant 7 : i32
    %209 = arith.addi %208, %c7_i32_55 : i32
    %210 = arith.index_cast %209 : i32 to index
    %211 = memref.load %arg2[%210] : memref<90xf32, #tpu.memory_space<smem>>
    %212 = vector.broadcast %211 : f32 to vector<1x26x110xf32>
    %213 = arith.mulf %9, %212 : vector<1x26x110xf32>
    %214 = arith.addf %207, %213 : vector<1x26x110xf32>
    %c9_i32_56 = arith.constant 9 : i32
    %215 = arith.muli %155, %c9_i32_56 : i32
    %c8_i32_57 = arith.constant 8 : i32
    %216 = arith.addi %215, %c8_i32_57 : i32
    %217 = arith.index_cast %216 : i32 to index
    %218 = memref.load %arg2[%217] : memref<90xf32, #tpu.memory_space<smem>>
    %219 = vector.broadcast %218 : f32 to vector<1x26x110xf32>
    %220 = arith.mulf %10, %219 : vector<1x26x110xf32>
    %221 = arith.addf %214, %220 : vector<1x26x110xf32>
    %cst_58 = arith.constant 0.000000e+00 : f32
    %222 = vector.broadcast %cst_58 : f32 to vector<1x26x110xf32>
    %223 = arith.maximumf %221, %222 : vector<1x26x110xf32>
    %c0_59 = arith.constant 0 : index
    %c2 = arith.constant 2 : index
    %c0_60 = arith.constant 0 : index
    %c0_61 = arith.constant 0 : index
    %224 = vector.load %arg4[%c0_59, %c2, %c0_60, %c0_61] : memref<1x5x26x110xf32, #tpu.memory_space<vmem>>, vector<1x1x26x110xf32>
    %225 = vector.shape_cast %224 : vector<1x1x26x110xf32> to vector<1x26x110xf32>
    %226 = vector.shape_cast %223 : vector<1x26x110xf32> to vector<1x1x26x110xf32>
    tpu.vector_store %arg4[%c0_59, %c2, %c0_60, %c0_61], %226 {strides = array<i32>} : memref<1x5x26x110xf32, #tpu.memory_space<vmem>>, vector<1x1x26x110xf32>,
    %c3_i32_62 = arith.constant 3 : i32
    %227 = arith.addi %0, %c3_i32_62 : i32
    %228 = arith.index_cast %227 : i32 to index
    %229 = memref.load %arg3[%228] : memref<10xf32, #tpu.memory_space<smem>>
    %230 = vector.broadcast %229 : f32 to vector<1x26x110xf32>
    %c9_i32_63 = arith.constant 9 : i32
    %231 = arith.muli %227, %c9_i32_63 : i32
    %c0_i32_64 = arith.constant 0 : i32
    %232 = arith.addi %231, %c0_i32_64 : i32
    %233 = arith.index_cast %232 : i32 to index
    %234 = memref.load %arg2[%233] : memref<90xf32, #tpu.memory_space<smem>>
    %235 = vector.broadcast %234 : f32 to vector<1x26x110xf32>
    %236 = arith.mulf %2, %235 : vector<1x26x110xf32>
    %237 = arith.addf %230, %236 : vector<1x26x110xf32>
    %c9_i32_65 = arith.constant 9 : i32
    %238 = arith.muli %227, %c9_i32_65 : i32
    %c1_i32_66 = arith.constant 1 : i32
    %239 = arith.addi %238, %c1_i32_66 : i32
    %240 = arith.index_cast %239 : i32 to index
    %241 = memref.load %arg2[%240] : memref<90xf32, #tpu.memory_space<smem>>
    %242 = vector.broadcast %241 : f32 to vector<1x26x110xf32>
    %243 = arith.mulf %3, %242 : vector<1x26x110xf32>
    %244 = arith.addf %237, %243 : vector<1x26x110xf32>
    %c9_i32_67 = arith.constant 9 : i32
    %245 = arith.muli %227, %c9_i32_67 : i32
    %c2_i32_68 = arith.constant 2 : i32
    %246 = arith.addi %245, %c2_i32_68 : i32
    %247 = arith.index_cast %246 : i32 to index
    %248 = memref.load %arg2[%247] : memref<90xf32, #tpu.memory_space<smem>>
    %249 = vector.broadcast %248 : f32 to vector<1x26x110xf32>
    %250 = arith.mulf %4, %249 : vector<1x26x110xf32>
    %251 = arith.addf %244, %250 : vector<1x26x110xf32>
    %c9_i32_69 = arith.constant 9 : i32
    %252 = arith.muli %227, %c9_i32_69 : i32
    %c3_i32_70 = arith.constant 3 : i32
    %253 = arith.addi %252, %c3_i32_70 : i32
    %254 = arith.index_cast %253 : i32 to index
    %255 = memref.load %arg2[%254] : memref<90xf32, #tpu.memory_space<smem>>
    %256 = vector.broadcast %255 : f32 to vector<1x26x110xf32>
    %257 = arith.mulf %5, %256 : vector<1x26x110xf32>
    %258 = arith.addf %251, %257 : vector<1x26x110xf32>
    %c9_i32_71 = arith.constant 9 : i32
    %259 = arith.muli %227, %c9_i32_71 : i32
    %c4_i32_72 = arith.constant 4 : i32
    %260 = arith.addi %259, %c4_i32_72 : i32
    %261 = arith.index_cast %260 : i32 to index
    %262 = memref.load %arg2[%261] : memref<90xf32, #tpu.memory_space<smem>>
    %263 = vector.broadcast %262 : f32 to vector<1x26x110xf32>
    %264 = arith.mulf %6, %263 : vector<1x26x110xf32>
    %265 = arith.addf %258, %264 : vector<1x26x110xf32>
    %c9_i32_73 = arith.constant 9 : i32
    %266 = arith.muli %227, %c9_i32_73 : i32
    %c5_i32_74 = arith.constant 5 : i32
    %267 = arith.addi %266, %c5_i32_74 : i32
    %268 = arith.index_cast %267 : i32 to index
    %269 = memref.load %arg2[%268] : memref<90xf32, #tpu.memory_space<smem>>
    %270 = vector.broadcast %269 : f32 to vector<1x26x110xf32>
    %271 = arith.mulf %7, %270 : vector<1x26x110xf32>
    %272 = arith.addf %265, %271 : vector<1x26x110xf32>
    %c9_i32_75 = arith.constant 9 : i32
    %273 = arith.muli %227, %c9_i32_75 : i32
    %c6_i32_76 = arith.constant 6 : i32
    %274 = arith.addi %273, %c6_i32_76 : i32
    %275 = arith.index_cast %274 : i32 to index
    %276 = memref.load %arg2[%275] : memref<90xf32, #tpu.memory_space<smem>>
    %277 = vector.broadcast %276 : f32 to vector<1x26x110xf32>
    %278 = arith.mulf %8, %277 : vector<1x26x110xf32>
    %279 = arith.addf %272, %278 : vector<1x26x110xf32>
    %c9_i32_77 = arith.constant 9 : i32
    %280 = arith.muli %227, %c9_i32_77 : i32
    %c7_i32_78 = arith.constant 7 : i32
    %281 = arith.addi %280, %c7_i32_78 : i32
    %282 = arith.index_cast %281 : i32 to index
    %283 = memref.load %arg2[%282] : memref<90xf32, #tpu.memory_space<smem>>
    %284 = vector.broadcast %283 : f32 to vector<1x26x110xf32>
    %285 = arith.mulf %9, %284 : vector<1x26x110xf32>
    %286 = arith.addf %279, %285 : vector<1x26x110xf32>
    %c9_i32_79 = arith.constant 9 : i32
    %287 = arith.muli %227, %c9_i32_79 : i32
    %c8_i32_80 = arith.constant 8 : i32
    %288 = arith.addi %287, %c8_i32_80 : i32
    %289 = arith.index_cast %288 : i32 to index
    %290 = memref.load %arg2[%289] : memref<90xf32, #tpu.memory_space<smem>>
    %291 = vector.broadcast %290 : f32 to vector<1x26x110xf32>
    %292 = arith.mulf %10, %291 : vector<1x26x110xf32>
    %293 = arith.addf %286, %292 : vector<1x26x110xf32>
    %cst_81 = arith.constant 0.000000e+00 : f32
    %294 = vector.broadcast %cst_81 : f32 to vector<1x26x110xf32>
    %295 = arith.maximumf %293, %294 : vector<1x26x110xf32>
    %c0_82 = arith.constant 0 : index
    %c3 = arith.constant 3 : index
    %c0_83 = arith.constant 0 : index
    %c0_84 = arith.constant 0 : index
    %296 = vector.load %arg4[%c0_82, %c3, %c0_83, %c0_84] : memref<1x5x26x110xf32, #tpu.memory_space<vmem>>, vector<1x1x26x110xf32>
    %297 = vector.shape_cast %296 : vector<1x1x26x110xf32> to vector<1x26x110xf32>
    %298 = vector.shape_cast %295 : vector<1x26x110xf32> to vector<1x1x26x110xf32>
    tpu.vector_store %arg4[%c0_82, %c3, %c0_83, %c0_84], %298 {strides = array<i32>} : memref<1x5x26x110xf32, #tpu.memory_space<vmem>>, vector<1x1x26x110xf32>,
    %c4_i32_85 = arith.constant 4 : i32
    %299 = arith.addi %0, %c4_i32_85 : i32
    %300 = arith.index_cast %299 : i32 to index
    %301 = memref.load %arg3[%300] : memref<10xf32, #tpu.memory_space<smem>>
    %302 = vector.broadcast %301 : f32 to vector<1x26x110xf32>
    %c9_i32_86 = arith.constant 9 : i32
    %303 = arith.muli %299, %c9_i32_86 : i32
    %c0_i32_87 = arith.constant 0 : i32
    %304 = arith.addi %303, %c0_i32_87 : i32
    %305 = arith.index_cast %304 : i32 to index
    %306 = memref.load %arg2[%305] : memref<90xf32, #tpu.memory_space<smem>>
    %307 = vector.broadcast %306 : f32 to vector<1x26x110xf32>
    %308 = arith.mulf %2, %307 : vector<1x26x110xf32>
    %309 = arith.addf %302, %308 : vector<1x26x110xf32>
    %c9_i32_88 = arith.constant 9 : i32
    %310 = arith.muli %299, %c9_i32_88 : i32
    %c1_i32_89 = arith.constant 1 : i32
    %311 = arith.addi %310, %c1_i32_89 : i32
    %312 = arith.index_cast %311 : i32 to index
    %313 = memref.load %arg2[%312] : memref<90xf32, #tpu.memory_space<smem>>
    %314 = vector.broadcast %313 : f32 to vector<1x26x110xf32>
    %315 = arith.mulf %3, %314 : vector<1x26x110xf32>
    %316 = arith.addf %309, %315 : vector<1x26x110xf32>
    %c9_i32_90 = arith.constant 9 : i32
    %317 = arith.muli %299, %c9_i32_90 : i32
    %c2_i32_91 = arith.constant 2 : i32
    %318 = arith.addi %317, %c2_i32_91 : i32
    %319 = arith.index_cast %318 : i32 to index
    %320 = memref.load %arg2[%319] : memref<90xf32, #tpu.memory_space<smem>>
    %321 = vector.broadcast %320 : f32 to vector<1x26x110xf32>
    %322 = arith.mulf %4, %321 : vector<1x26x110xf32>
    %323 = arith.addf %316, %322 : vector<1x26x110xf32>
    %c9_i32_92 = arith.constant 9 : i32
    %324 = arith.muli %299, %c9_i32_92 : i32
    %c3_i32_93 = arith.constant 3 : i32
    %325 = arith.addi %324, %c3_i32_93 : i32
    %326 = arith.index_cast %325 : i32 to index
    %327 = memref.load %arg2[%326] : memref<90xf32, #tpu.memory_space<smem>>
    %328 = vector.broadcast %327 : f32 to vector<1x26x110xf32>
    %329 = arith.mulf %5, %328 : vector<1x26x110xf32>
    %330 = arith.addf %323, %329 : vector<1x26x110xf32>
    %c9_i32_94 = arith.constant 9 : i32
    %331 = arith.muli %299, %c9_i32_94 : i32
    %c4_i32_95 = arith.constant 4 : i32
    %332 = arith.addi %331, %c4_i32_95 : i32
    %333 = arith.index_cast %332 : i32 to index
    %334 = memref.load %arg2[%333] : memref<90xf32, #tpu.memory_space<smem>>
    %335 = vector.broadcast %334 : f32 to vector<1x26x110xf32>
    %336 = arith.mulf %6, %335 : vector<1x26x110xf32>
    %337 = arith.addf %330, %336 : vector<1x26x110xf32>
    %c9_i32_96 = arith.constant 9 : i32
    %338 = arith.muli %299, %c9_i32_96 : i32
    %c5_i32_97 = arith.constant 5 : i32
    %339 = arith.addi %338, %c5_i32_97 : i32
    %340 = arith.index_cast %339 : i32 to index
    %341 = memref.load %arg2[%340] : memref<90xf32, #tpu.memory_space<smem>>
    %342 = vector.broadcast %341 : f32 to vector<1x26x110xf32>
    %343 = arith.mulf %7, %342 : vector<1x26x110xf32>
    %344 = arith.addf %337, %343 : vector<1x26x110xf32>
    %c9_i32_98 = arith.constant 9 : i32
    %345 = arith.muli %299, %c9_i32_98 : i32
    %c6_i32_99 = arith.constant 6 : i32
    %346 = arith.addi %345, %c6_i32_99 : i32
    %347 = arith.index_cast %346 : i32 to index
    %348 = memref.load %arg2[%347] : memref<90xf32, #tpu.memory_space<smem>>
    %349 = vector.broadcast %348 : f32 to vector<1x26x110xf32>
    %350 = arith.mulf %8, %349 : vector<1x26x110xf32>
    %351 = arith.addf %344, %350 : vector<1x26x110xf32>
    %c9_i32_100 = arith.constant 9 : i32
    %352 = arith.muli %299, %c9_i32_100 : i32
    %c7_i32_101 = arith.constant 7 : i32
    %353 = arith.addi %352, %c7_i32_101 : i32
    %354 = arith.index_cast %353 : i32 to index
    %355 = memref.load %arg2[%354] : memref<90xf32, #tpu.memory_space<smem>>
    %356 = vector.broadcast %355 : f32 to vector<1x26x110xf32>
    %357 = arith.mulf %9, %356 : vector<1x26x110xf32>
    %358 = arith.addf %351, %357 : vector<1x26x110xf32>
    %c9_i32_102 = arith.constant 9 : i32
    %359 = arith.muli %299, %c9_i32_102 : i32
    %c8_i32_103 = arith.constant 8 : i32
    %360 = arith.addi %359, %c8_i32_103 : i32
    %361 = arith.index_cast %360 : i32 to index
    %362 = memref.load %arg2[%361] : memref<90xf32, #tpu.memory_space<smem>>
    %363 = vector.broadcast %362 : f32 to vector<1x26x110xf32>
    %364 = arith.mulf %10, %363 : vector<1x26x110xf32>
    %365 = arith.addf %358, %364 : vector<1x26x110xf32>
    %cst_104 = arith.constant 0.000000e+00 : f32
    %366 = vector.broadcast %cst_104 : f32 to vector<1x26x110xf32>
    %367 = arith.maximumf %365, %366 : vector<1x26x110xf32>
    %c0_105 = arith.constant 0 : index
    %c4 = arith.constant 4 : index
    %c0_106 = arith.constant 0 : index
    %c0_107 = arith.constant 0 : index
    %368 = vector.load %arg4[%c0_105, %c4, %c0_106, %c0_107] : memref<1x5x26x110xf32, #tpu.memory_space<vmem>>, vector<1x1x26x110xf32>
    %369 = vector.shape_cast %368 : vector<1x1x26x110xf32> to vector<1x26x110xf32>
    %370 = vector.shape_cast %367 : vector<1x26x110xf32> to vector<1x1x26x110xf32>
    tpu.vector_store %arg4[%c0_105, %c4, %c0_106, %c0_107], %370 {strides = array<i32>} : memref<1x5x26x110xf32, #tpu.memory_space<vmem>>, vector<1x1x26x110xf32>,
    return
  }
  func.func @transform_0(%arg0: i32) -> (i32, i32, i32) {
    %c0_i32 = arith.constant 0 : i32
    %c0_i32_0 = arith.constant 0 : i32
    %c0_i32_1 = arith.constant 0 : i32
    %c0_i32_2 = arith.constant 0 : i32
    return %c0_i32, %c0_i32_0, %c0_i32_1 : i32, i32, i32
  }
  func.func @transform_1(%arg0: i32) -> i32 {
    %c0_i32 = arith.constant 0 : i32
    %c0_i32_0 = arith.constant 0 : i32
    return %c0_i32 : i32
  }
  func.func @transform_2(%arg0: i32) -> i32 {
    %c0_i32 = arith.constant 0 : i32
    %c0_i32_0 = arith.constant 0 : i32
    return %c0_i32 : i32
  }
  func.func @transform_3(%arg0: i32) -> (i32, i32, i32, i32) {
    %c0_i32 = arith.constant 0 : i32
    %c0_i32_0 = arith.constant 0 : i32
    %c0_i32_1 = arith.constant 0 : i32
    %c0_i32_2 = arith.constant 0 : i32
    return %c0_i32, %arg0, %c0_i32_0, %c0_i32_1 : i32, i32, i32, i32
  }
}

</mosaic_0001>

<llo_original>
// kernel: tpu_custom_call.1
$region0: #{tpu_custom_call.1}
  #allocation0 [shape = 'u32[]', space=smem, size = 0x4, offset = 0x4, fixed_abs, tag = 'smem constant byte address 0x4 - core index']
  #allocation1 [shape = 'u32[144,128]{1,0:T(1,128)}', space=vmem, size = 0x12000, scoped, tag = 'internal scratch']
  %s0 = inlined_call_operand.vmem [shape: f32[1,28,112], index: 0, kind: input, shape index: {}]
  %s1 = inlined_call_operand.vmem [shape: f32[90], index: 1, kind: input, shape index: {}]
  %s2 = inlined_call_operand.vmem [shape: f32[10], index: 2, kind: input, shape index: {}]
  %s3 = inlined_call_operand.vmem [shape: f32[1,10,26,110], index: 3, kind: output, shape index: {}]
  %s4 = sld [smem:[#allocation0]]
  $region53: #{tpu_custom_call.1} parent=0
    _
  %s6 = ssub.s32 1, %s4
  %s7 = scalar_select 0, %s6, %s4
  $region1: #{tpu_custom_call.1} parent=0
    #allocation2 [shape = 'u8[512]{0}', space=smem, size = 0x200, scoped, tag = 'input window, operand 1, single buffered']
    #allocation3 [shape = 's32[2]{0}', space=sflag, size = 0x8, scoped, tag = 'scoped memory for tpu_custom_call.1']
    #allocation4 [shape = 'u8[512]{0}', space=smem, size = 0x200, scoped, tag = 'input window, operand 2, single buffered']
    #allocation5 [shape = 's32[1]{0}', space=sflag, size = 0x4, scoped, tag = 'scoped memory for tpu_custom_call.1']
    %8 = vsyncpa [#allocation3], 0
    %9 = vsyncpa [#allocation5], 0
    loop: start=0, step=1, limit=4
    $region2: #{tpu_custom_call.1} parent=1 // loop_pre_header
      _
    $region3: #{tpu_custom_call.1} parent=1 // loop_header
      %s11 = sphi 0, %s15
      %p12 = scmp.ge.s32.totalorder %s11, 4
      %s19 = sphi 0, %s19
      %s21 = sphi 0, %s19
      %s22 = sphi 0, %s21
      %s36 = sphi 0, %s22
      %s40 = sphi 0, %s40
      %s42 = sphi 0, %s40
      %s43 = sphi 0, %s42
      %s57 = sphi 0, %s43
      %s61 = sphi 0, %s61
      %s63 = sphi 0, %s61
      %s64 = sphi 0, %s63
      %s78 = sphi 0, %s64
      %s84 = sphi 0, %s86
      %s87 = sphi 0, %s84
      %s88 = sphi 0, %s87
      %s104 = sphi 0, %s88
    $region4: #{tpu_custom_call.1} parent=1 // loop_header_branch
      %14 = sbr.rel (%p12) target = $region8
    $region5: #{tpu_custom_call.1} parent=1 // loop_body
      %s16 = ssub.s32 %s11, 1
      %s17 = ssub.s32 %s11, 2
      %s18 = sadd.s32 %s11, 1
      %s20 = sadd.s32 %s19, 1
      %p23 = scmp.eq.s32.totalorder %s11, 1
      %p24 = scmp.ne.s32.totalorder %s19, %s21
      %p25 = scmp.eq.s32.totalorder %s11, 0
      %p26 = por %p24, %p25
      %p27 = scmp.ne.s32.totalorder %s19, %s21
      %p28 = scmp.eq.s32.totalorder %s16, 1
      %p29 = por %p27, %p28
      %p30 = scmp.ne.s32.totalorder %s21, %s22
      %p31 = scmp.eq.s32.totalorder %s16, 0
      %p32 = por %p30, %p31
      %p33 = scmp.ne.s32.totalorder %s21, %s22
      %p34 = scmp.eq.s32.totalorder %s17, 1
      %p35 = por %p33, %p34
      %p37 = scmp.ne.s32.totalorder %s22, %s36
      %p38 = scmp.eq.s32.totalorder %s17, 0
      %p39 = por %p37, %p38
      %s41 = sadd.s32 %s40, 1
      %p44 = scmp.eq.s32.totalorder %s11, 1
      %p45 = scmp.ne.s32.totalorder %s40, %s42
      %p46 = scmp.eq.s32.totalorder %s11, 0
      %p47 = por %p45, %p46
      %p48 = scmp.ne.s32.totalorder %s40, %s42
      %p49 = scmp.eq.s32.totalorder %s16, 1
      %p50 = por %p48, %p49
      %p51 = scmp.ne.s32.totalorder %s42, %s43
      %p52 = scmp.eq.s32.totalorder %s16, 0
      %p53 = por %p51, %p52
      %p54 = scmp.ne.s32.totalorder %s42, %s43
      %p55 = scmp.eq.s32.totalorder %s17, 1
      %p56 = por %p54, %p55
      %p58 = scmp.ne.s32.totalorder %s43, %s57
      %p59 = scmp.eq.s32.totalorder %s17, 0
      %p60 = por %p58, %p59
      %s62 = sadd.s32 %s61, 1
      %p65 = scmp.eq.s32.totalorder %s11, 1
      %p66 = scmp.ne.s32.totalorder %s61, %s63
      %p67 = scmp.eq.s32.totalorder %s11, 0
      %p68 = por %p66, %p67
      %p69 = scmp.ne.s32.totalorder %s61, %s63
      %p70 = scmp.eq.s32.totalorder %s16, 1
      %p71 = por %p69, %p70
      %p72 = scmp.ne.s32.totalorder %s63, %s64
      %p73 = scmp.eq.s32.totalorder %s16, 0
      %p74 = por %p72, %p73
      %p75 = scmp.ne.s32.totalorder %s63, %s64
      %p76 = scmp.eq.s32.totalorder %s17, 1
      %p77 = por %p75, %p76
      %p79 = scmp.ne.s32.totalorder %s64, %s78
      %p80 = scmp.eq.s32.totalorder %s17, 0
      %p81 = por %p79, %p80
      %s82 = ssub.s32 %s11, %s18
      %p83 = scmp.eq.s32.totalorder %s82, 0
      %s85 = sadd.s32 %s84, 1
      %s86 = scalar_select %p83, %s84, %s85
      %p89 = pneg %p83
      %p90 = scmp.eq.s32.totalorder %s11, 1
      %p91 = por %p89, %p90
      %p92 = scmp.ne.s32.totalorder %s84, %s87
      %p93 = scmp.eq.s32.totalorder %s11, 0
      %p94 = por %p92, %p93
      %p95 = scmp.ne.s32.totalorder %s84, %s87
      %p96 = scmp.eq.s32.totalorder %s16, 1
      %p97 = por %p95, %p96
      %p98 = scmp.ne.s32.totalorder %s87, %s88
      %p99 = scmp.eq.s32.totalorder %s16, 0
      %p100 = por %p98, %p99
      %p101 = scmp.ne.s32.totalorder %s87, %s88
      %p102 = scmp.eq.s32.totalorder %s17, 1
      %p103 = por %p101, %p102
      %p105 = scmp.ne.s32.totalorder %s88, %s104
      %p106 = scmp.eq.s32.totalorder %s17, 0
      %p107 = por %p105, %p106
      %p108 = scmp.le.s32.totalorder 1, %s11
      %p109 = scmp.lt.s32.totalorder %s11, 3
      %p110 = pnand %p108, %p109
      %p111 = pneg %p110
      // Predicated region
      $region9: #{tpu_custom_call.1} parent=5 // pred_check
        _
      $region10: #{tpu_custom_call.1} parent=5 // pred_check_branch
        %113 = sbr.rel (%p110) target = $region12
      $region11: #{tpu_custom_call.1} parent=5 // pred_region
        %s114 = ssub.s32 %s11, 1
        // Predicated region
        $region13: #{tpu_custom_call.1} parent=11 // pred_check
          %p115 = pneg %p32
        $region14: #{tpu_custom_call.1} parent=11 // pred_check_branch
          %117 = sbr.rel (%p115) target = $region16
        $region15: #{tpu_custom_call.1} parent=11 // pred_region
          _
        $region16: #{tpu_custom_call.1} parent=11 // pred_fallthru
          _
        // Predicated region
        $region17: #{tpu_custom_call.1} parent=11 // pred_check
          %p118 = pneg %p53
        $region18: #{tpu_custom_call.1} parent=11 // pred_check_branch
          %120 = sbr.rel (%p118) target = $region20
        $region19: #{tpu_custom_call.1} parent=11 // pred_region
          %s122 = ssub.s32 16, 16
          %123 = vsyncadd [#allocation3], %s122
          %s125 = sshll.u32 %s1, 4
          %s126 = int_to_ptr.vmem [resolvable:$true] %s125
          %128 = dma.vmem_to_smem %s126, 16, [#allocation2], [#allocation3]
        $region20: #{tpu_custom_call.1} parent=11 // pred_fallthru
          _
        // Predicated region
        $region21: #{tpu_custom_call.1} parent=11 // pred_check
          %p129 = pneg %p74
        $region22: #{tpu_custom_call.1} parent=11 // pred_check_branch
          %131 = sbr.rel (%p129) target = $region24
        $region23: #{tpu_custom_call.1} parent=11 // pred_region
          %s133 = ssub.s32 16, 16
          %134 = vsyncadd [#allocation5], %s133
          %s136 = sshll.u32 %s2, 4
          %s137 = int_to_ptr.vmem [resolvable:$true] %s136
          %139 = dma.vmem_to_smem %s137, 16, [#allocation4], [#allocation5]
        $region24: #{tpu_custom_call.1} parent=11 // pred_fallthru
          _
      $region12: #{tpu_custom_call.1} parent=5 // pred_fallthru
        _
      %p140 = scmp.lt.s32.totalorder %s11, 2
      // Predicated region
      $region25: #{tpu_custom_call.1} parent=5 // pred_check
        %p141 = pneg %p140
      $region26: #{tpu_custom_call.1} parent=5 // pred_check_branch
        %143 = sbr.rel (%p141) target = $region28
      $region27: #{tpu_custom_call.1} parent=5 // pred_region
        _
      $region28: #{tpu_custom_call.1} parent=5 // pred_fallthru
        _
      %p144 = scmp.le.s32.totalorder 1, %s11
      %p145 = scmp.lt.s32.totalorder %s11, 3
      %p146 = pnand %p144, %p145
      %p147 = pneg %p146
      // Predicated region
      $region29: #{tpu_custom_call.1} parent=5 // pred_check
        _
      $region30: #{tpu_custom_call.1} parent=5 // pred_check_branch
        %149 = sbr.rel (%p146) target = $region32
      $region31: #{tpu_custom_call.1} parent=5 // pred_region
        %s150 = ssub.s32 %s11, 1
        // Predicated region
        $region33: #{tpu_custom_call.1} parent=31 // pred_check
          %p151 = pneg %p53
        $region34: #{tpu_custom_call.1} parent=31 // pred_check_branch
          %153 = sbr.rel (%p151) target = $region36
        $region35: #{tpu_custom_call.1} parent=31 // pred_region
          %154 = dma.done [#allocation3], 16
        $region36: #{tpu_custom_call.1} parent=31 // pred_fallthru
          _
        // Predicated region
        $region37: #{tpu_custom_call.1} parent=31 // pred_check
          %p155 = pneg %p74
        $region38: #{tpu_custom_call.1} parent=31 // pred_check_branch
          %157 = sbr.rel (%p155) target = $region40
        $region39: #{tpu_custom_call.1} parent=31 // pred_region
          %158 = dma.done [#allocation5], 16
        $region40: #{tpu_custom_call.1} parent=31 // pred_fallthru
          _
        %159 = sfence
        %p160 = pneg %p32
        %p161 = pneg %p29
        %p162 = pneg %p53
        %p163 = pneg %p50
        %p164 = pneg %p74
        %p165 = pneg %p71
        %p166 = pneg %p100
        %p167 = pneg %p97
        %s168 = smul.u32 5, %s16
        %p169 = scmp.lt.s32.totalorder %s168, 9
        %s170 = scalar_select %p169, %s168, 9
        %s171 = smul.addr %s170, 4
        %s172 = smul.addr %s171, 8
        %s173 = scalar_lea.vmem %s3, %s172
        %s174 = smul.u32 5, %s16
        %p175 = scmp.lt.s32.totalorder %s174, 9
        %s176 = scalar_select %p175, %s174, 9
        %s177 = smul.addr %s176, 4
        %s178 = smul.addr %s177, 8
        %s179 = scalar_lea.vmem %s3, %s178
        %s180 = smul.u32 5, %s16
        %s181 = smul.u32 %s16, 5
        %v182 = vld [vmem:[%s0] sm:$0xff]
        %v183 = vld [vmem:[%s0 + $0x8] sm:$0xff]
        %v184 = vld [vmem:[%s0 + $0x10] sm:$0xff]
        %v185 = vld [vmem:[%s0 + $0x18] sm:$0xf]
        %s186 = sld [smem:[#allocation4 + %s181]]
        %v187 = vstv %s186
        %s188 = smul.u32 %s16, 45
        %s189 = sld [smem:[#allocation2 + %s188]]
        %v190 = vstv %s189
        %v191 = vmul.f32 %v182, %v190
        %v192 = vmul.f32 %v183, %v190
        %v193 = vmul.f32 %v184, %v190
        %v194 = vmul.f32 %v185, %v190
        %v195 = vadd.f32 %v187, %v191
        %v196 = vadd.f32 %v187, %v192
        %v197 = vadd.f32 %v187, %v193
        %v198 = vadd.f32 %v187, %v194
        %s199 = sadd.s32 %s188, 1
        %s200 = sld [smem:[#allocation2 + %s199]]
        %v201 = vstv %s200
        %v202 = vmul.f32 %v182, %v201
        %v203 = vmul.f32 %v183, %v201
        %v204 = vmul.f32 %v184, %v201
        %v205 = vmul.f32 %v185, %v201
        %210 = vrot.lane.b32.xlu0 %v202, 127
        %v211 = vpop.permute.xlu0 %210
        %212 = vrot.lane.b32.xlu0 %v203, 127
        %v213 = vpop.permute.xlu0 %212
        %214 = vrot.lane.b32.xlu0 %v204, 127
        %v215 = vpop.permute.xlu0 %214
        %216 = vrot.lane.b32.xlu0 %v205, 127
        %v217 = vpop.permute.xlu0 %216
        %v222 = vadd.f32 %v195, %v211
        %v223 = vadd.f32 %v196, %v213
        %v224 = vadd.f32 %v197, %v215
        %v225 = vadd.f32 %v198, %v217
        %s226 = sadd.s32 %s188, 2
        %s227 = sld [smem:[#allocation2 + %s226]]
        %v228 = vstv %s227
        %v229 = vmul.f32 %v182, %v228
        %v230 = vmul.f32 %v183, %v228
        %v231 = vmul.f32 %v184, %v228
        %v232 = vmul.f32 %v185, %v228
        %237 = vrot.lane.b32.xlu0 %v229, 126
        %v238 = vpop.permute.xlu0 %237
        %239 = vrot.lane.b32.xlu0 %v230, 126
        %v240 = vpop.permute.xlu0 %239
        %241 = vrot.lane.b32.xlu0 %v231, 126
        %v242 = vpop.permute.xlu0 %241
        %243 = vrot.lane.b32.xlu0 %v232, 126
        %v244 = vpop.permute.xlu0 %243
        %v249 = vadd.f32 %v222, %v238
        %v250 = vadd.f32 %v223, %v240
        %v251 = vadd.f32 %v224, %v242
        %v252 = vadd.f32 %v225, %v244
        %s253 = sadd.s32 %s188, 3
        %s254 = sld [smem:[#allocation2 + %s253]]
        %v255 = vstv %s254
        %v256 = vmul.f32 %v182, %v255
        %v257 = vmul.f32 %v183, %v255
        %v258 = vmul.f32 %v184, %v255
        %v259 = vmul.f32 %v185, %v255
        %vm264 = vcmask 1046528
        %v265 = vrot.slane %v256, 1
        %v266 = vrot.slane %v257, 1
        %v267 = vsel %vm264, %v265, %v266
        %v268 = vrot.slane %v258, 1
        %v269 = vsel %vm264, %v266, %v268
        %v270 = vrot.slane %v259, 1
        %v271 = vsel %vm264, %v268, %v270
        %v276 = vadd.f32 %v249, %v267
        %v277 = vadd.f32 %v250, %v269
        %v278 = vadd.f32 %v251, %v271
        %v279 = vadd.f32 %v252, %v270
        %s280 = sadd.s32 %s188, 4
        %s281 = sld [smem:[#allocation2 + %s280]]
        %v282 = vstv %s281
        %v283 = vmul.f32 %v182, %v282
        %v284 = vmul.f32 %v183, %v282
        %v285 = vmul.f32 %v184, %v282
        %v286 = vmul.f32 %v185, %v282
        %v291 = vrot.slane %v283, 1
        %v292 = vrot.slane %v284, 1
        %v293 = vsel %vm264, %v291, %v292
        %v294 = vrot.slane %v285, 1
        %v295 = vsel %vm264, %v292, %v294
        %v296 = vrot.slane %v286, 1
        %v297 = vsel %vm264, %v294, %v296
        %298 = vrot.lane.b32.xlu0 %v293, 127
        %v299 = vpop.permute.xlu0 %298
        %300 = vrot.lane.b32.xlu0 %v295, 127
        %v301 = vpop.permute.xlu0 %300
        %302 = vrot.lane.b32.xlu0 %v297, 127
        %v303 = vpop.permute.xlu0 %302
        %304 = vrot.lane.b32.xlu0 %v296, 127
        %v305 = vpop.permute.xlu0 %304
        %v310 = vadd.f32 %v276, %v299
        %v311 = vadd.f32 %v277, %v301
        %v312 = vadd.f32 %v278, %v303
        %v313 = vadd.f32 %v279, %v305
        %s314 = sadd.s32 %s188, 5
        %s315 = sld [smem:[#allocation2 + %s314]]
        %v316 = vstv %s315
        %v317 = vmul.f32 %v182, %v316
        %v318 = vmul.f32 %v183, %v316
        %v319 = vmul.f32 %v184, %v316
        %v320 = vmul.f32 %v185, %v316
        %v325 = vrot.slane %v317, 1
        %v326 = vrot.slane %v318, 1
        %v327 = vsel %vm264, %v325, %v326
        %v328 = vrot.slane %v319, 1
        %v329 = vsel %vm264, %v326, %v328
        %v330 = vrot.slane %v320, 1
        %v331 = vsel %vm264, %v328, %v330
        %332 = vrot.lane.b32.xlu0 %v327, 126
        %v333 = vpop.permute.xlu0 %332
        %334 = vrot.lane.b32.xlu0 %v329, 126
        %v335 = vpop.permute.xlu0 %334
        %336 = vrot.lane.b32.xlu0 %v331, 126
        %v337 = vpop.permute.xlu0 %336
        %338 = vrot.lane.b32.xlu0 %v330, 126
        %v339 = vpop.permute.xlu0 %338
        %v344 = vadd.f32 %v310, %v333
        %v345 = vadd.f32 %v311, %v335
        %v346 = vadd.f32 %v312, %v337
        %v347 = vadd.f32 %v313, %v339
        %s348 = sadd.s32 %s188, 6
        %s349 = sld [smem:[#allocation2 + %s348]]
        %v350 = vstv %s349
        %v351 = vmul.f32 %v182, %v350
        %v352 = vmul.f32 %v183, %v350
        %v353 = vmul.f32 %v184, %v350
        %v354 = vmul.f32 %v185, %v350
        %vm359 = vcmask 1045504
        %v360 = vrot.slane %v351, 2
        %v361 = vrot.slane %v352, 2
        %v362 = vsel %vm359, %v360, %v361
        %v363 = vrot.slane %v353, 2
        %v364 = vsel %vm359, %v361, %v363
        %v365 = vrot.slane %v354, 2
        %v366 = vsel %vm359, %v363, %v365
        %v371 = vadd.f32 %v344, %v362
        %v372 = vadd.f32 %v345, %v364
        %v373 = vadd.f32 %v346, %v366
        %v374 = vadd.f32 %v347, %v365
        %s375 = sadd.s32 %s188, 7
        %s376 = sld [smem:[#allocation2 + %s375]]
        %v377 = vstv %s376
        %v378 = vmul.f32 %v182, %v377
        %v379 = vmul.f32 %v183, %v377
        %v380 = vmul.f32 %v184, %v377
        %v381 = vmul.f32 %v185, %v377
        %v386 = vrot.slane %v378, 2
        %v387 = vrot.slane %v379, 2
        %v388 = vsel %vm359, %v386, %v387
        %v389 = vrot.slane %v380, 2
        %v390 = vsel %vm359, %v387, %v389
        %v391 = vrot.slane %v381, 2
        %v392 = vsel %vm359, %v389, %v391
        %393 = vrot.lane.b32.xlu0 %v388, 127
        %v394 = vpop.permute.xlu0 %393
        %395 = vrot.lane.b32.xlu0 %v390, 127
        %v396 = vpop.permute.xlu0 %395
        %397 = vrot.lane.b32.xlu0 %v392, 127
        %v398 = vpop.permute.xlu0 %397
        %399 = vrot.lane.b32.xlu0 %v391, 127
        %v400 = vpop.permute.xlu0 %399
        %v405 = vadd.f32 %v371, %v394
        %v406 = vadd.f32 %v372, %v396
        %v407 = vadd.f32 %v373, %v398
        %v408 = vadd.f32 %v374, %v400
        %s409 = sadd.s32 %s188, 8
        %s410 = sld [smem:[#allocation2 + %s409]]
        %v411 = vstv %s410
        %v412 = vmul.f32 %v182, %v411
        %v413 = vmul.f32 %v183, %v411
        %v414 = vmul.f32 %v184, %v411
        %v415 = vmul.f32 %v185, %v411
        %v420 = vrot.slane %v412, 2
        %v421 = vrot.slane %v413, 2
        %v422 = vsel %vm359, %v420, %v421
        %v423 = vrot.slane %v414, 2
        %v424 = vsel %vm359, %v421, %v423
        %v425 = vrot.slane %v415, 2
        %v426 = vsel %vm359, %v423, %v425
        %427 = vrot.lane.b32.xlu0 %v422, 126
        %v428 = vpop.permute.xlu0 %427
        %429 = vrot.lane.b32.xlu0 %v424, 126
        %v430 = vpop.permute.xlu0 %429
        %431 = vrot.lane.b32.xlu0 %v426, 126
        %v432 = vpop.permute.xlu0 %431
        %433 = vrot.lane.b32.xlu0 %v425, 126
        %v434 = vpop.permute.xlu0 %433
        %v439 = vadd.f32 %v405, %v428
        %v440 = vadd.f32 %v406, %v430
        %v441 = vadd.f32 %v407, %v432
        %v442 = vadd.f32 %v408, %v434
        %v443 = vmax.f32 %v439, 0.0
        %v444 = vmax.f32 %v440, 0.0
        %v445 = vmax.f32 %v441, 0.0
        %v446 = vmax.f32 %v442, 0.0
        %vm447 = vcmask 900096
        %448 = vst.msk [vmem:[%s179] sm:$0xff] %vm447, %v443
        %449 = vst.msk [vmem:[%s179 + $0x8] sm:$0xff] %vm447, %v444
        %450 = vst.msk [vmem:[%s179 + $0x10] sm:$0xff] %vm447, %v445
        %vm451 = vcmask 893952
        %452 = vst.msk [vmem:[%s179 + $0x18] sm:$0x3] %vm451, %v446
        %s453 = sadd.s32 %s181, 1
        %s454 = sld [smem:[#allocation4 + %s453]]
        %v455 = vstv %s454
        %s456 = smul.u32 %s453, 9
        %s457 = sld [smem:[#allocation2 + %s456]]
        %v458 = vstv %s457
        %v459 = vmul.f32 %v182, %v458
        %v460 = vmul.f32 %v183, %v458
        %v461 = vmul.f32 %v184, %v458
        %v462 = vmul.f32 %v185, %v458
        %v463 = vadd.f32 %v455, %v459
        %v464 = vadd.f32 %v455, %v460
        %v465 = vadd.f32 %v455, %v461
        %v466 = vadd.f32 %v455, %v462
        %s467 = sadd.s32 %s456, 1
        %s468 = sld [smem:[#allocation2 + %s467]]
        %v469 = vstv %s468
        %v470 = vmul.f32 %v182, %v469
        %v471 = vmul.f32 %v183, %v469
        %v472 = vmul.f32 %v184, %v469
        %v473 = vmul.f32 %v185, %v469
        %478 = vrot.lane.b32.xlu0 %v470, 127
        %v479 = vpop.permute.xlu0 %478
        %480 = vrot.lane.b32.xlu0 %v471, 127
        %v481 = vpop.permute.xlu0 %480
        %482 = vrot.lane.b32.xlu0 %v472, 127
        %v483 = vpop.permute.xlu0 %482
        %484 = vrot.lane.b32.xlu0 %v473, 127
        %v485 = vpop.permute.xlu0 %484
        %v490 = vadd.f32 %v463, %v479
        %v491 = vadd.f32 %v464, %v481
        %v492 = vadd.f32 %v465, %v483
        %v493 = vadd.f32 %v466, %v485
        %s494 = sadd.s32 %s456, 2
        %s495 = sld [smem:[#allocation2 + %s494]]
        %v496 = vstv %s495
        %v497 = vmul.f32 %v182, %v496
        %v498 = vmul.f32 %v183, %v496
        %v499 = vmul.f32 %v184, %v496
        %v500 = vmul.f32 %v185, %v496
        %505 = vrot.lane.b32.xlu0 %v497, 126
        %v506 = vpop.permute.xlu0 %505
        %507 = vrot.lane.b32.xlu0 %v498, 126
        %v508 = vpop.permute.xlu0 %507
        %509 = vrot.lane.b32.xlu0 %v499, 126
        %v510 = vpop.permute.xlu0 %509
        %511 = vrot.lane.b32.xlu0 %v500, 126
        %v512 = vpop.permute.xlu0 %511
        %v517 = vadd.f32 %v490, %v506
        %v518 = vadd.f32 %v491, %v508
        %v519 = vadd.f32 %v492, %v510
        %v520 = vadd.f32 %v493, %v512
        %s521 = sadd.s32 %s456, 3
        %s522 = sld [smem:[#allocation2 + %s521]]
        %v523 = vstv %s522
        %v524 = vmul.f32 %v182, %v523
        %v525 = vmul.f32 %v183, %v523
        %v526 = vmul.f32 %v184, %v523
        %v527 = vmul.f32 %v185, %v523
        %v532 = vrot.slane %v524, 1
        %v533 = vrot.slane %v525, 1
        %v534 = vsel %vm264, %v532, %v533
        %v535 = vrot.slane %v526, 1
        %v536 = vsel %vm264, %v533, %v535
        %v537 = vrot.slane %v527, 1
        %v538 = vsel %vm264, %v535, %v537
        %v543 = vadd.f32 %v517, %v534
        %v544 = vadd.f32 %v518, %v536
        %v545 = vadd.f32 %v519, %v538
        %v546 = vadd.f32 %v520, %v537
        %s547 = sadd.s32 %s456, 4
        %s548 = sld [smem:[#allocation2 + %s547]]
        %v549 = vstv %s548
        %v550 = vmul.f32 %v182, %v549
        %v551 = vmul.f32 %v183, %v549
        %v552 = vmul.f32 %v184, %v549
        %v553 = vmul.f32 %v185, %v549
        %v558 = vrot.slane %v550, 1
        %v559 = vrot.slane %v551, 1
        %v560 = vsel %vm264, %v558, %v559
        %v561 = vrot.slane %v552, 1
        %v562 = vsel %vm264, %v559, %v561
        %v563 = vrot.slane %v553, 1
        %v564 = vsel %vm264, %v561, %v563
        %565 = vrot.lane.b32.xlu0 %v560, 127
        %v566 = vpop.permute.xlu0 %565
        %567 = vrot.lane.b32.xlu0 %v562, 127
        %v568 = vpop.permute.xlu0 %567
        %569 = vrot.lane.b32.xlu0 %v564, 127
        %v570 = vpop.permute.xlu0 %569
        %571 = vrot.lane.b32.xlu0 %v563, 127
        %v572 = vpop.permute.xlu0 %571
        %v577 = vadd.f32 %v543, %v566
        %v578 = vadd.f32 %v544, %v568
        %v579 = vadd.f32 %v545, %v570
        %v580 = vadd.f32 %v546, %v572
        %s581 = sadd.s32 %s456, 5
        %s582 = sld [smem:[#allocation2 + %s581]]
        %v583 = vstv %s582
        %v584 = vmul.f32 %v182, %v583
        %v585 = vmul.f32 %v183, %v583
        %v586 = vmul.f32 %v184, %v583
        %v587 = vmul.f32 %v185, %v583
        %v592 = vrot.slane %v584, 1
        %v593 = vrot.slane %v585, 1
        %v594 = vsel %vm264, %v592, %v593
        %v595 = vrot.slane %v586, 1
        %v596 = vsel %vm264, %v593, %v595
        %v597 = vrot.slane %v587, 1
        %v598 = vsel %vm264, %v595, %v597
        %599 = vrot.lane.b32.xlu0 %v594, 126
        %v600 = vpop.permute.xlu0 %599
        %601 = vrot.lane.b32.xlu0 %v596, 126
        %v602 = vpop.permute.xlu0 %601
        %603 = vrot.lane.b32.xlu0 %v598, 126
        %v604 = vpop.permute.xlu0 %603
        %605 = vrot.lane.b32.xlu0 %v597, 126
        %v606 = vpop.permute.xlu0 %605
        %v611 = vadd.f32 %v577, %v600
        %v612 = vadd.f32 %v578, %v602
        %v613 = vadd.f32 %v579, %v604
        %v614 = vadd.f32 %v580, %v606
        %s615 = sadd.s32 %s456, 6
        %s616 = sld [smem:[#allocation2 + %s615]]
        %v617 = vstv %s616
        %v618 = vmul.f32 %v182, %v617
        %v619 = vmul.f32 %v183, %v617
        %v620 = vmul.f32 %v184, %v617
        %v621 = vmul.f32 %v185, %v617
        %v626 = vrot.slane %v618, 2
        %v627 = vrot.slane %v619, 2
        %v628 = vsel %vm359, %v626, %v627
        %v629 = vrot.slane %v620, 2
        %v630 = vsel %vm359, %v627, %v629
        %v631 = vrot.slane %v621, 2
        %v632 = vsel %vm359, %v629, %v631
        %v637 = vadd.f32 %v611, %v628
        %v638 = vadd.f32 %v612, %v630
        %v639 = vadd.f32 %v613, %v632
        %v640 = vadd.f32 %v614, %v631
        %s641 = sadd.s32 %s456, 7
        %s642 = sld [smem:[#allocation2 + %s641]]
        %v643 = vstv %s642
        %v644 = vmul.f32 %v182, %v643
        %v645 = vmul.f32 %v183, %v643
        %v646 = vmul.f32 %v184, %v643
        %v647 = vmul.f32 %v185, %v643
        %v652 = vrot.slane %v644, 2
        %v653 = vrot.slane %v645, 2
        %v654 = vsel %vm359, %v652, %v653
        %v655 = vrot.slane %v646, 2
        %v656 = vsel %vm359, %v653, %v655
        %v657 = vrot.slane %v647, 2
        %v658 = vsel %vm359, %v655, %v657
        %659 = vrot.lane.b32.xlu0 %v654, 127
        %v660 = vpop.permute.xlu0 %659
        %661 = vrot.lane.b32.xlu0 %v656, 127
        %v662 = vpop.permute.xlu0 %661
        %663 = vrot.lane.b32.xlu0 %v658, 127
        %v664 = vpop.permute.xlu0 %663
        %665 = vrot.lane.b32.xlu0 %v657, 127
        %v666 = vpop.permute.xlu0 %665
        %v671 = vadd.f32 %v637, %v660
        %v672 = vadd.f32 %v638, %v662
        %v673 = vadd.f32 %v639, %v664
        %v674 = vadd.f32 %v640, %v666
        %s675 = sadd.s32 %s456, 8
        %s676 = sld [smem:[#allocation2 + %s675]]
        %v677 = vstv %s676
        %v678 = vmul.f32 %v182, %v677
        %v679 = vmul.f32 %v183, %v677
        %v680 = vmul.f32 %v184, %v677
        %v681 = vmul.f32 %v185, %v677
        %v686 = vrot.slane %v678, 2
        %v687 = vrot.slane %v679, 2
        %v688 = vsel %vm359, %v686, %v687
        %v689 = vrot.slane %v680, 2
        %v690 = vsel %vm359, %v687, %v689
        %v691 = vrot.slane %v681, 2
        %v692 = vsel %vm359, %v689, %v691
        %693 = vrot.lane.b32.xlu0 %v688, 126
        %v694 = vpop.permute.xlu0 %693
        %695 = vrot.lane.b32.xlu0 %v690, 126
        %v696 = vpop.permute.xlu0 %695
        %697 = vrot.lane.b32.xlu0 %v692, 126
        %v698 = vpop.permute.xlu0 %697
        %699 = vrot.lane.b32.xlu0 %v691, 126
        %v700 = vpop.permute.xlu0 %699
        %v705 = vadd.f32 %v671, %v694
        %v706 = vadd.f32 %v672, %v696
        %v707 = vadd.f32 %v673, %v698
        %v708 = vadd.f32 %v674, %v700
        %v709 = vmax.f32 %v705, 0.0
        %v710 = vmax.f32 %v706, 0.0
        %v711 = vmax.f32 %v707, 0.0
        %v712 = vmax.f32 %v708, 0.0
        %s713 = scalar_lea.vmem %s179, 32
        %714 = vst.msk [vmem:[%s713] sm:$0xff] %vm447, %v709
        %715 = vst.msk [vmem:[%s713 + $0x8] sm:$0xff] %vm447, %v710
        %716 = vst.msk [vmem:[%s713 + $0x10] sm:$0xff] %vm447, %v711
        %717 = vst.msk [vmem:[%s713 + $0x18] sm:$0x3] %vm451, %v712
        %s718 = sadd.s32 %s181, 2
        %s719 = sld [smem:[#allocation4 + %s718]]
        %v720 = vstv %s719
        %s721 = smul.u32 %s718, 9
        %s722 = sld [smem:[#allocation2 + %s721]]
        %v723 = vstv %s722
        %v724 = vmul.f32 %v182, %v723
        %v725 = vmul.f32 %v183, %v723
        %v726 = vmul.f32 %v184, %v723
        %v727 = vmul.f32 %v185, %v723
        %v728 = vadd.f32 %v720, %v724
        %v729 = vadd.f32 %v720, %v725
        %v730 = vadd.f32 %v720, %v726
        %v731 = vadd.f32 %v720, %v727
        %s732 = sadd.s32 %s721, 1
        %s733 = sld [smem:[#allocation2 + %s732]]
        %v734 = vstv %s733
        %v735 = vmul.f32 %v182, %v734
        %v736 = vmul.f32 %v183, %v734
        %v737 = vmul.f32 %v184, %v734
        %v738 = vmul.f32 %v185, %v734
        %743 = vrot.lane.b32.xlu0 %v735, 127
        %v744 = vpop.permute.xlu0 %743
        %745 = vrot.lane.b32.xlu0 %v736, 127
        %v746 = vpop.permute.xlu0 %745
        %747 = vrot.lane.b32.xlu0 %v737, 127
        %v748 = vpop.permute.xlu0 %747
        %749 = vrot.lane.b32.xlu0 %v738, 127
        %v750 = vpop.permute.xlu0 %749
        %v755 = vadd.f32 %v728, %v744
        %v756 = vadd.f32 %v729, %v746
        %v757 = vadd.f32 %v730, %v748
        %v758 = vadd.f32 %v731, %v750
        %s759 = sadd.s32 %s721, 2
        %s760 = sld [smem:[#allocation2 + %s759]]
        %v761 = vstv %s760
        %v762 = vmul.f32 %v182, %v761
        %v763 = vmul.f32 %v183, %v761
        %v764 = vmul.f32 %v184, %v761
        %v765 = vmul.f32 %v185, %v761
        %770 = vrot.lane.b32.xlu0 %v762, 126
        %v771 = vpop.permute.xlu0 %770
        %772 = vrot.lane.b32.xlu0 %v763, 126
        %v773 = vpop.permute.xlu0 %772
        %774 = vrot.lane.b32.xlu0 %v764, 126
        %v775 = vpop.permute.xlu0 %774
        %776 = vrot.lane.b32.xlu0 %v765, 126
        %v777 = vpop.permute.xlu0 %776
        %v782 = vadd.f32 %v755, %v771
        %v783 = vadd.f32 %v756, %v773
        %v784 = vadd.f32 %v757, %v775
        %v785 = vadd.f32 %v758, %v777
        %s786 = sadd.s32 %s721, 3
        %s787 = sld [smem:[#allocation2 + %s786]]
        %v788 = vstv %s787
        %v789 = vmul.f32 %v182, %v788
        %v790 = vmul.f32 %v183, %v788
        %v791 = vmul.f32 %v184, %v788
        %v792 = vmul.f32 %v185, %v788
        %v797 = vrot.slane %v789, 1
        %v798 = vrot.slane %v790, 1
        %v799 = vsel %vm264, %v797, %v798
        %v800 = vrot.slane %v791, 1
        %v801 = vsel %vm264, %v798, %v800
        %v802 = vrot.slane %v792, 1
        %v803 = vsel %vm264, %v800, %v802
        %v808 = vadd.f32 %v782, %v799
        %v809 = vadd.f32 %v783, %v801
        %v810 = vadd.f32 %v784, %v803
        %v811 = vadd.f32 %v785, %v802
        %s812 = sadd.s32 %s721, 4
        %s813 = sld [smem:[#allocation2 + %s812]]
        %v814 = vstv %s813
        %v815 = vmul.f32 %v182, %v814
        %v816 = vmul.f32 %v183, %v814
        %v817 = vmul.f32 %v184, %v814
        %v818 = vmul.f32 %v185, %v814
        %v823 = vrot.slane %v815, 1
        %v824 = vrot.slane %v816, 1
        %v825 = vsel %vm264, %v823, %v824
        %v826 = vrot.slane %v817, 1
        %v827 = vsel %vm264, %v824, %v826
        %v828 = vrot.slane %v818, 1
        %v829 = vsel %vm264, %v826, %v828
        %830 = vrot.lane.b32.xlu0 %v825, 127
        %v831 = vpop.permute.xlu0 %830
        %832 = vrot.lane.b32.xlu0 %v827, 127
        %v833 = vpop.permute.xlu0 %832
        %834 = vrot.lane.b32.xlu0 %v829, 127
        %v835 = vpop.permute.xlu0 %834
        %836 = vrot.lane.b32.xlu0 %v828, 127
        %v837 = vpop.permute.xlu0 %836
        %v842 = vadd.f32 %v808, %v831
        %v843 = vadd.f32 %v809, %v833
        %v844 = vadd.f32 %v810, %v835
        %v845 = vadd.f32 %v811, %v837
        %s846 = sadd.s32 %s721, 5
        %s847 = sld [smem:[#allocation2 + %s846]]
        %v848 = vstv %s847
        %v849 = vmul.f32 %v182, %v848
        %v850 = vmul.f32 %v183, %v848
        %v851 = vmul.f32 %v184, %v848
        %v852 = vmul.f32 %v185, %v848
        %v857 = vrot.slane %v849, 1
        %v858 = vrot.slane %v850, 1
        %v859 = vsel %vm264, %v857, %v858
        %v860 = vrot.slane %v851, 1
        %v861 = vsel %vm264, %v858, %v860
        %v862 = vrot.slane %v852, 1
        %v863 = vsel %vm264, %v860, %v862
        %864 = vrot.lane.b32.xlu0 %v859, 126
        %v865 = vpop.permute.xlu0 %864
        %866 = vrot.lane.b32.xlu0 %v861, 126
        %v867 = vpop.permute.xlu0 %866
        %868 = vrot.lane.b32.xlu0 %v863, 126
        %v869 = vpop.permute.xlu0 %868
        %870 = vrot.lane.b32.xlu0 %v862, 126
        %v871 = vpop.permute.xlu0 %870
        %v876 = vadd.f32 %v842, %v865
        %v877 = vadd.f32 %v843, %v867
        %v878 = vadd.f32 %v844, %v869
        %v879 = vadd.f32 %v845, %v871
        %s880 = sadd.s32 %s721, 6
        %s881 = sld [smem:[#allocation2 + %s880]]
        %v882 = vstv %s881
        %v883 = vmul.f32 %v182, %v882
        %v884 = vmul.f32 %v183, %v882
        %v885 = vmul.f32 %v184, %v882
        %v886 = vmul.f32 %v185, %v882
        %v891 = vrot.slane %v883, 2
        %v892 = vrot.slane %v884, 2
        %v893 = vsel %vm359, %v891, %v892
        %v894 = vrot.slane %v885, 2
        %v895 = vsel %vm359, %v892, %v894
        %v896 = vrot.slane %v886, 2
        %v897 = vsel %vm359, %v894, %v896
        %v902 = vadd.f32 %v876, %v893
        %v903 = vadd.f32 %v877, %v895
        %v904 = vadd.f32 %v878, %v897
        %v905 = vadd.f32 %v879, %v896
        %s906 = sadd.s32 %s721, 7
        %s907 = sld [smem:[#allocation2 + %s906]]
        %v908 = vstv %s907
        %v909 = vmul.f32 %v182, %v908
        %v910 = vmul.f32 %v183, %v908
        %v911 = vmul.f32 %v184, %v908
        %v912 = vmul.f32 %v185, %v908
        %v917 = vrot.slane %v909, 2
        %v918 = vrot.slane %v910, 2
        %v919 = vsel %vm359, %v917, %v918
        %v920 = vrot.slane %v911, 2
        %v921 = vsel %vm359, %v918, %v920
        %v922 = vrot.slane %v912, 2
        %v923 = vsel %vm359, %v920, %v922
        %924 = vrot.lane.b32.xlu0 %v919, 127
        %v925 = vpop.permute.xlu0 %924
        %926 = vrot.lane.b32.xlu0 %v921, 127
        %v927 = vpop.permute.xlu0 %926
        %928 = vrot.lane.b32.xlu0 %v923, 127
        %v929 = vpop.permute.xlu0 %928
        %930 = vrot.lane.b32.xlu0 %v922, 127
        %v931 = vpop.permute.xlu0 %930
        %v936 = vadd.f32 %v902, %v925
        %v937 = vadd.f32 %v903, %v927
        %v938 = vadd.f32 %v904, %v929
        %v939 = vadd.f32 %v905, %v931
        %s940 = sadd.s32 %s721, 8
        %s941 = sld [smem:[#allocation2 + %s940]]
        %v942 = vstv %s941
        %v943 = vmul.f32 %v182, %v942
        %v944 = vmul.f32 %v183, %v942
        %v945 = vmul.f32 %v184, %v942
        %v946 = vmul.f32 %v185, %v942
        %v951 = vrot.slane %v943, 2
        %v952 = vrot.slane %v944, 2
        %v953 = vsel %vm359, %v951, %v952
        %v954 = vrot.slane %v945, 2
        %v955 = vsel %vm359, %v952, %v954
        %v956 = vrot.slane %v946, 2
        %v957 = vsel %vm359, %v954, %v956
        %958 = vrot.lane.b32.xlu0 %v953, 126
        %v959 = vpop.permute.xlu0 %958
        %960 = vrot.lane.b32.xlu0 %v955, 126
        %v961 = vpop.permute.xlu0 %960
        %962 = vrot.lane.b32.xlu0 %v957, 126
        %v963 = vpop.permute.xlu0 %962
        %964 = vrot.lane.b32.xlu0 %v956, 126
        %v965 = vpop.permute.xlu0 %964
        %v970 = vadd.f32 %v936, %v959
        %v971 = vadd.f32 %v937, %v961
        %v972 = vadd.f32 %v938, %v963
        %v973 = vadd.f32 %v939, %v965
        %v974 = vmax.f32 %v970, 0.0
        %v975 = vmax.f32 %v971, 0.0
        %v976 = vmax.f32 %v972, 0.0
        %v977 = vmax.f32 %v973, 0.0
        %s978 = scalar_lea.vmem %s179, 64
        %979 = vst.msk [vmem:[%s978] sm:$0xff] %vm447, %v974
        %980 = vst.msk [vmem:[%s978 + $0x8] sm:$0xff] %vm447, %v975
        %981 = vst.msk [vmem:[%s978 + $0x10] sm:$0xff] %vm447, %v976
        %982 = vst.msk [vmem:[%s978 + $0x18] sm:$0x3] %vm451, %v977
        %s983 = sadd.s32 %s181, 3
        %s984 = sld [smem:[#allocation4 + %s983]]
        %v985 = vstv %s984
        %s986 = smul.u32 %s983, 9
        %s987 = sld [smem:[#allocation2 + %s986]]
        %v988 = vstv %s987
        %v989 = vmul.f32 %v182, %v988
        %v990 = vmul.f32 %v183, %v988
        %v991 = vmul.f32 %v184, %v988
        %v992 = vmul.f32 %v185, %v988
        %v993 = vadd.f32 %v985, %v989
        %v994 = vadd.f32 %v985, %v990
        %v995 = vadd.f32 %v985, %v991
        %v996 = vadd.f32 %v985, %v992
        %s997 = sadd.s32 %s986, 1
        %s998 = sld [smem:[#allocation2 + %s997]]
        %v999 = vstv %s998
        %v1000 = vmul.f32 %v182, %v999
        %v1001 = vmul.f32 %v183, %v999
        %v1002 = vmul.f32 %v184, %v999
        %v1003 = vmul.f32 %v185, %v999
        %1008 = vrot.lane.b32.xlu0 %v1000, 127
        %v1009 = vpop.permute.xlu0 %1008
        %1010 = vrot.lane.b32.xlu0 %v1001, 127
        %v1011 = vpop.permute.xlu0 %1010
        %1012 = vrot.lane.b32.xlu0 %v1002, 127
        %v1013 = vpop.permute.xlu0 %1012
        %1014 = vrot.lane.b32.xlu0 %v1003, 127
        %v1015 = vpop.permute.xlu0 %1014
        %v1020 = vadd.f32 %v993, %v1009
        %v1021 = vadd.f32 %v994, %v1011
        %v1022 = vadd.f32 %v995, %v1013
        %v1023 = vadd.f32 %v996, %v1015
        %s1024 = sadd.s32 %s986, 2
        %s1025 = sld [smem:[#allocation2 + %s1024]]
        %v1026 = vstv %s1025
        %v1027 = vmul.f32 %v182, %v1026
        %v1028 = vmul.f32 %v183, %v1026
        %v1029 = vmul.f32 %v184, %v1026
        %v1030 = vmul.f32 %v185, %v1026
        %1035 = vrot.lane.b32.xlu0 %v1027, 126
        %v1036 = vpop.permute.xlu0 %1035
        %1037 = vrot.lane.b32.xlu0 %v1028, 126
        %v1038 = vpop.permute.xlu0 %1037
        %1039 = vrot.lane.b32.xlu0 %v1029, 126
        %v1040 = vpop.permute.xlu0 %1039
        %1041 = vrot.lane.b32.xlu0 %v1030, 126
        %v1042 = vpop.permute.xlu0 %1041
        %v1047 = vadd.f32 %v1020, %v1036
        %v1048 = vadd.f32 %v1021, %v1038
        %v1049 = vadd.f32 %v1022, %v1040
        %v1050 = vadd.f32 %v1023, %v1042
        %s1051 = sadd.s32 %s986, 3
        %s1052 = sld [smem:[#allocation2 + %s1051]]
        %v1053 = vstv %s1052
        %v1054 = vmul.f32 %v182, %v1053
        %v1055 = vmul.f32 %v183, %v1053
        %v1056 = vmul.f32 %v184, %v1053
        %v1057 = vmul.f32 %v185, %v1053
        %v1062 = vrot.slane %v1054, 1
        %v1063 = vrot.slane %v1055, 1
        %v1064 = vsel %vm264, %v1062, %v1063
        %v1065 = vrot.slane %v1056, 1
        %v1066 = vsel %vm264, %v1063, %v1065
        %v1067 = vrot.slane %v1057, 1
        %v1068 = vsel %vm264, %v1065, %v1067
        %v1073 = vadd.f32 %v1047, %v1064
        %v1074 = vadd.f32 %v1048, %v1066
        %v1075 = vadd.f32 %v1049, %v1068
        %v1076 = vadd.f32 %v1050, %v1067
        %s1077 = sadd.s32 %s986, 4
        %s1078 = sld [smem:[#allocation2 + %s1077]]
        %v1079 = vstv %s1078
        %v1080 = vmul.f32 %v182, %v1079
        %v1081 = vmul.f32 %v183, %v1079
        %v1082 = vmul.f32 %v184, %v1079
        %v1083 = vmul.f32 %v185, %v1079
        %v1088 = vrot.slane %v1080, 1
        %v1089 = vrot.slane %v1081, 1
        %v1090 = vsel %vm264, %v1088, %v1089
        %v1091 = vrot.slane %v1082, 1
        %v1092 = vsel %vm264, %v1089, %v1091
        %v1093 = vrot.slane %v1083, 1
        %v1094 = vsel %vm264, %v1091, %v1093
        %1095 = vrot.lane.b32.xlu0 %v1090, 127
        %v1096 = vpop.permute.xlu0 %1095
        %1097 = vrot.lane.b32.xlu0 %v1092, 127
        %v1098 = vpop.permute.xlu0 %1097
        %1099 = vrot.lane.b32.xlu0 %v1094, 127
        %v1100 = vpop.permute.xlu0 %1099
        %1101 = vrot.lane.b32.xlu0 %v1093, 127
        %v1102 = vpop.permute.xlu0 %1101
        %v1107 = vadd.f32 %v1073, %v1096
        %v1108 = vadd.f32 %v1074, %v1098
        %v1109 = vadd.f32 %v1075, %v1100
        %v1110 = vadd.f32 %v1076, %v1102
        %s1111 = sadd.s32 %s986, 5
        %s1112 = sld [smem:[#allocation2 + %s1111]]
        %v1113 = vstv %s1112
        %v1114 = vmul.f32 %v182, %v1113
        %v1115 = vmul.f32 %v183, %v1113
        %v1116 = vmul.f32 %v184, %v1113
        %v1117 = vmul.f32 %v185, %v1113
        %v1122 = vrot.slane %v1114, 1
        %v1123 = vrot.slane %v1115, 1
        %v1124 = vsel %vm264, %v1122, %v1123
        %v1125 = vrot.slane %v1116, 1
        %v1126 = vsel %vm264, %v1123, %v1125
        %v1127 = vrot.slane %v1117, 1
        %v1128 = vsel %vm264, %v1125, %v1127
        %1129 = vrot.lane.b32.xlu0 %v1124, 126
        %v1130 = vpop.permute.xlu0 %1129
        %1131 = vrot.lane.b32.xlu0 %v1126, 126
        %v1132 = vpop.permute.xlu0 %1131
        %1133 = vrot.lane.b32.xlu0 %v1128, 126
        %v1134 = vpop.permute.xlu0 %1133
        %1135 = vrot.lane.b32.xlu0 %v1127, 126
        %v1136 = vpop.permute.xlu0 %1135
        %v1141 = vadd.f32 %v1107, %v1130
        %v1142 = vadd.f32 %v1108, %v1132
        %v1143 = vadd.f32 %v1109, %v1134
        %v1144 = vadd.f32 %v1110, %v1136
        %s1145 = sadd.s32 %s986, 6
        %s1146 = sld [smem:[#allocation2 + %s1145]]
        %v1147 = vstv %s1146
        %v1148 = vmul.f32 %v182, %v1147
        %v1149 = vmul.f32 %v183, %v1147
        %v1150 = vmul.f32 %v184, %v1147
        %v1151 = vmul.f32 %v185, %v1147
        %v1156 = vrot.slane %v1148, 2
        %v1157 = vrot.slane %v1149, 2
        %v1158 = vsel %vm359, %v1156, %v1157
        %v1159 = vrot.slane %v1150, 2
        %v1160 = vsel %vm359, %v1157, %v1159
        %v1161 = vrot.slane %v1151, 2
        %v1162 = vsel %vm359, %v1159, %v1161
        %v1167 = vadd.f32 %v1141, %v1158
        %v1168 = vadd.f32 %v1142, %v1160
        %v1169 = vadd.f32 %v1143, %v1162
        %v1170 = vadd.f32 %v1144, %v1161
        %s1171 = sadd.s32 %s986, 7
        %s1172 = sld [smem:[#allocation2 + %s1171]]
        %v1173 = vstv %s1172
        %v1174 = vmul.f32 %v182, %v1173
        %v1175 = vmul.f32 %v183, %v1173
        %v1176 = vmul.f32 %v184, %v1173
        %v1177 = vmul.f32 %v185, %v1173
        %v1182 = vrot.slane %v1174, 2
        %v1183 = vrot.slane %v1175, 2
        %v1184 = vsel %vm359, %v1182, %v1183
        %v1185 = vrot.slane %v1176, 2
        %v1186 = vsel %vm359, %v1183, %v1185
        %v1187 = vrot.slane %v1177, 2
        %v1188 = vsel %vm359, %v1185, %v1187
        %1189 = vrot.lane.b32.xlu0 %v1184, 127
        %v1190 = vpop.permute.xlu0 %1189
        %1191 = vrot.lane.b32.xlu0 %v1186, 127
        %v1192 = vpop.permute.xlu0 %1191
        %1193 = vrot.lane.b32.xlu0 %v1188, 127
        %v1194 = vpop.permute.xlu0 %1193
        %1195 = vrot.lane.b32.xlu0 %v1187, 127
        %v1196 = vpop.permute.xlu0 %1195
        %v1201 = vadd.f32 %v1167, %v1190
        %v1202 = vadd.f32 %v1168, %v1192
        %v1203 = vadd.f32 %v1169, %v1194
        %v1204 = vadd.f32 %v1170, %v1196
        %s1205 = sadd.s32 %s986, 8
        %s1206 = sld [smem:[#allocation2 + %s1205]]
        %v1207 = vstv %s1206
        %v1208 = vmul.f32 %v182, %v1207
        %v1209 = vmul.f32 %v183, %v1207
        %v1210 = vmul.f32 %v184, %v1207
        %v1211 = vmul.f32 %v185, %v1207
        %v1216 = vrot.slane %v1208, 2
        %v1217 = vrot.slane %v1209, 2
        %v1218 = vsel %vm359, %v1216, %v1217
        %v1219 = vrot.slane %v1210, 2
        %v1220 = vsel %vm359, %v1217, %v1219
        %v1221 = vrot.slane %v1211, 2
        %v1222 = vsel %vm359, %v1219, %v1221
        %1223 = vrot.lane.b32.xlu0 %v1218, 126
        %v1224 = vpop.permute.xlu0 %1223
        %1225 = vrot.lane.b32.xlu0 %v1220, 126
        %v1226 = vpop.permute.xlu0 %1225
        %1227 = vrot.lane.b32.xlu0 %v1222, 126
        %v1228 = vpop.permute.xlu0 %1227
        %1229 = vrot.lane.b32.xlu0 %v1221, 126
        %v1230 = vpop.permute.xlu0 %1229
        %v1235 = vadd.f32 %v1201, %v1224
        %v1236 = vadd.f32 %v1202, %v1226
        %v1237 = vadd.f32 %v1203, %v1228
        %v1238 = vadd.f32 %v1204, %v1230
        %v1239 = vmax.f32 %v1235, 0.0
        %v1240 = vmax.f32 %v1236, 0.0
        %v1241 = vmax.f32 %v1237, 0.0
        %v1242 = vmax.f32 %v1238, 0.0
        %s1243 = scalar_lea.vmem %s179, 96
        %1244 = vst.msk [vmem:[%s1243] sm:$0xff] %vm447, %v1239
        %1245 = vst.msk [vmem:[%s1243 + $0x8] sm:$0xff] %vm447, %v1240
        %1246 = vst.msk [vmem:[%s1243 + $0x10] sm:$0xff] %vm447, %v1241
        %1247 = vst.msk [vmem:[%s1243 + $0x18] sm:$0x3] %vm451, %v1242
        %s1248 = sadd.s32 %s181, 4
        %s1249 = sld [smem:[#allocation4 + %s1248]]
        %v1250 = vstv %s1249
        %s1251 = smul.u32 %s1248, 9
        %s1252 = sld [smem:[#allocation2 + %s1251]]
        %v1253 = vstv %s1252
        %v1254 = vmul.f32 %v182, %v1253
        %v1255 = vmul.f32 %v183, %v1253
        %v1256 = vmul.f32 %v184, %v1253
        %v1257 = vmul.f32 %v185, %v1253
        %v1258 = vadd.f32 %v1250, %v1254
        %v1259 = vadd.f32 %v1250, %v1255
        %v1260 = vadd.f32 %v1250, %v1256
        %v1261 = vadd.f32 %v1250, %v1257
        %s1262 = sadd.s32 %s1251, 1
        %s1263 = sld [smem:[#allocation2 + %s1262]]
        %v1264 = vstv %s1263
        %v1265 = vmul.f32 %v182, %v1264
        %v1266 = vmul.f32 %v183, %v1264
        %v1267 = vmul.f32 %v184, %v1264
        %v1268 = vmul.f32 %v185, %v1264
        %1273 = vrot.lane.b32.xlu0 %v1265, 127
        %v1274 = vpop.permute.xlu0 %1273
        %1275 = vrot.lane.b32.xlu0 %v1266, 127
        %v1276 = vpop.permute.xlu0 %1275
        %1277 = vrot.lane.b32.xlu0 %v1267, 127
        %v1278 = vpop.permute.xlu0 %1277
        %1279 = vrot.lane.b32.xlu0 %v1268, 127
        %v1280 = vpop.permute.xlu0 %1279
        %v1285 = vadd.f32 %v1258, %v1274
        %v1286 = vadd.f32 %v1259, %v1276
        %v1287 = vadd.f32 %v1260, %v1278
        %v1288 = vadd.f32 %v1261, %v1280
        %s1289 = sadd.s32 %s1251, 2
        %s1290 = sld [smem:[#allocation2 + %s1289]]
        %v1291 = vstv %s1290
        %v1292 = vmul.f32 %v182, %v1291
        %v1293 = vmul.f32 %v183, %v1291
        %v1294 = vmul.f32 %v184, %v1291
        %v1295 = vmul.f32 %v185, %v1291
        %1300 = vrot.lane.b32.xlu0 %v1292, 126
        %v1301 = vpop.permute.xlu0 %1300
        %1302 = vrot.lane.b32.xlu0 %v1293, 126
        %v1303 = vpop.permute.xlu0 %1302
        %1304 = vrot.lane.b32.xlu0 %v1294, 126
        %v1305 = vpop.permute.xlu0 %1304
        %1306 = vrot.lane.b32.xlu0 %v1295, 126
        %v1307 = vpop.permute.xlu0 %1306
        %v1312 = vadd.f32 %v1285, %v1301
        %v1313 = vadd.f32 %v1286, %v1303
        %v1314 = vadd.f32 %v1287, %v1305
        %v1315 = vadd.f32 %v1288, %v1307
        %s1316 = sadd.s32 %s1251, 3
        %s1317 = sld [smem:[#allocation2 + %s1316]]
        %v1318 = vstv %s1317
        %v1319 = vmul.f32 %v182, %v1318
        %v1320 = vmul.f32 %v183, %v1318
        %v1321 = vmul.f32 %v184, %v1318
        %v1322 = vmul.f32 %v185, %v1318
        %v1327 = vrot.slane %v1319, 1
        %v1328 = vrot.slane %v1320, 1
        %v1329 = vsel %vm264, %v1327, %v1328
        %v1330 = vrot.slane %v1321, 1
        %v1331 = vsel %vm264, %v1328, %v1330
        %v1332 = vrot.slane %v1322, 1
        %v1333 = vsel %vm264, %v1330, %v1332
        %v1338 = vadd.f32 %v1312, %v1329
        %v1339 = vadd.f32 %v1313, %v1331
        %v1340 = vadd.f32 %v1314, %v1333
        %v1341 = vadd.f32 %v1315, %v1332
        %s1342 = sadd.s32 %s1251, 4
        %s1343 = sld [smem:[#allocation2 + %s1342]]
        %v1344 = vstv %s1343
        %v1345 = vmul.f32 %v182, %v1344
        %v1346 = vmul.f32 %v183, %v1344
        %v1347 = vmul.f32 %v184, %v1344
        %v1348 = vmul.f32 %v185, %v1344
        %v1353 = vrot.slane %v1345, 1
        %v1354 = vrot.slane %v1346, 1
        %v1355 = vsel %vm264, %v1353, %v1354
        %v1356 = vrot.slane %v1347, 1
        %v1357 = vsel %vm264, %v1354, %v1356
        %v1358 = vrot.slane %v1348, 1
        %v1359 = vsel %vm264, %v1356, %v1358
        %1360 = vrot.lane.b32.xlu0 %v1355, 127
        %v1361 = vpop.permute.xlu0 %1360
        %1362 = vrot.lane.b32.xlu0 %v1357, 127
        %v1363 = vpop.permute.xlu0 %1362
        %1364 = vrot.lane.b32.xlu0 %v1359, 127
        %v1365 = vpop.permute.xlu0 %1364
        %1366 = vrot.lane.b32.xlu0 %v1358, 127
        %v1367 = vpop.permute.xlu0 %1366
        %v1372 = vadd.f32 %v1338, %v1361
        %v1373 = vadd.f32 %v1339, %v1363
        %v1374 = vadd.f32 %v1340, %v1365
        %v1375 = vadd.f32 %v1341, %v1367
        %s1376 = sadd.s32 %s1251, 5
        %s1377 = sld [smem:[#allocation2 + %s1376]]
        %v1378 = vstv %s1377
        %v1379 = vmul.f32 %v182, %v1378
        %v1380 = vmul.f32 %v183, %v1378
        %v1381 = vmul.f32 %v184, %v1378
        %v1382 = vmul.f32 %v185, %v1378
        %v1387 = vrot.slane %v1379, 1
        %v1388 = vrot.slane %v1380, 1
        %v1389 = vsel %vm264, %v1387, %v1388
        %v1390 = vrot.slane %v1381, 1
        %v1391 = vsel %vm264, %v1388, %v1390
        %v1392 = vrot.slane %v1382, 1
        %v1393 = vsel %vm264, %v1390, %v1392
        %1394 = vrot.lane.b32.xlu0 %v1389, 126
        %v1395 = vpop.permute.xlu0 %1394
        %1396 = vrot.lane.b32.xlu0 %v1391, 126
        %v1397 = vpop.permute.xlu0 %1396
        %1398 = vrot.lane.b32.xlu0 %v1393, 126
        %v1399 = vpop.permute.xlu0 %1398
        %1400 = vrot.lane.b32.xlu0 %v1392, 126
        %v1401 = vpop.permute.xlu0 %1400
        %v1406 = vadd.f32 %v1372, %v1395
        %v1407 = vadd.f32 %v1373, %v1397
        %v1408 = vadd.f32 %v1374, %v1399
        %v1409 = vadd.f32 %v1375, %v1401
        %s1410 = sadd.s32 %s1251, 6
        %s1411 = sld [smem:[#allocation2 + %s1410]]
        %v1412 = vstv %s1411
        %v1413 = vmul.f32 %v182, %v1412
        %v1414 = vmul.f32 %v183, %v1412
        %v1415 = vmul.f32 %v184, %v1412
        %v1416 = vmul.f32 %v185, %v1412
        %v1421 = vrot.slane %v1413, 2
        %v1422 = vrot.slane %v1414, 2
        %v1423 = vsel %vm359, %v1421, %v1422
        %v1424 = vrot.slane %v1415, 2
        %v1425 = vsel %vm359, %v1422, %v1424
        %v1426 = vrot.slane %v1416, 2
        %v1427 = vsel %vm359, %v1424, %v1426
        %v1432 = vadd.f32 %v1406, %v1423
        %v1433 = vadd.f32 %v1407, %v1425
        %v1434 = vadd.f32 %v1408, %v1427
        %v1435 = vadd.f32 %v1409, %v1426
        %s1436 = sadd.s32 %s1251, 7
        %s1437 = sld [smem:[#allocation2 + %s1436]]
        %v1438 = vstv %s1437
        %v1439 = vmul.f32 %v182, %v1438
        %v1440 = vmul.f32 %v183, %v1438
        %v1441 = vmul.f32 %v184, %v1438
        %v1442 = vmul.f32 %v185, %v1438
        %v1447 = vrot.slane %v1439, 2
        %v1448 = vrot.slane %v1440, 2
        %v1449 = vsel %vm359, %v1447, %v1448
        %v1450 = vrot.slane %v1441, 2
        %v1451 = vsel %vm359, %v1448, %v1450
        %v1452 = vrot.slane %v1442, 2
        %v1453 = vsel %vm359, %v1450, %v1452
        %1454 = vrot.lane.b32.xlu0 %v1449, 127
        %v1455 = vpop.permute.xlu0 %1454
        %1456 = vrot.lane.b32.xlu0 %v1451, 127
        %v1457 = vpop.permute.xlu0 %1456
        %1458 = vrot.lane.b32.xlu0 %v1453, 127
        %v1459 = vpop.permute.xlu0 %1458
        %1460 = vrot.lane.b32.xlu0 %v1452, 127
        %v1461 = vpop.permute.xlu0 %1460
        %v1466 = vadd.f32 %v1432, %v1455
        %v1467 = vadd.f32 %v1433, %v1457
        %v1468 = vadd.f32 %v1434, %v1459
        %v1469 = vadd.f32 %v1435, %v1461
        %s1470 = sadd.s32 %s1251, 8
        %s1471 = sld [smem:[#allocation2 + %s1470]]
        %v1472 = vstv %s1471
        %v1473 = vmul.f32 %v182, %v1472
        %v1474 = vmul.f32 %v183, %v1472
        %v1475 = vmul.f32 %v184, %v1472
        %v1476 = vmul.f32 %v185, %v1472
        %v1481 = vrot.slane %v1473, 2
        %v1482 = vrot.slane %v1474, 2
        %v1483 = vsel %vm359, %v1481, %v1482
        %v1484 = vrot.slane %v1475, 2
        %v1485 = vsel %vm359, %v1482, %v1484
        %v1486 = vrot.slane %v1476, 2
        %v1487 = vsel %vm359, %v1484, %v1486
        %1488 = vrot.lane.b32.xlu0 %v1483, 126
        %v1489 = vpop.permute.xlu0 %1488
        %1490 = vrot.lane.b32.xlu0 %v1485, 126
        %v1491 = vpop.permute.xlu0 %1490
        %1492 = vrot.lane.b32.xlu0 %v1487, 126
        %v1493 = vpop.permute.xlu0 %1492
        %1494 = vrot.lane.b32.xlu0 %v1486, 126
        %v1495 = vpop.permute.xlu0 %1494
        %v1500 = vadd.f32 %v1466, %v1489
        %v1501 = vadd.f32 %v1467, %v1491
        %v1502 = vadd.f32 %v1468, %v1493
        %v1503 = vadd.f32 %v1469, %v1495
        %v1504 = vmax.f32 %v1500, 0.0
        %v1505 = vmax.f32 %v1501, 0.0
        %v1506 = vmax.f32 %v1502, 0.0
        %v1507 = vmax.f32 %v1503, 0.0
        %s1508 = scalar_lea.vmem %s179, 128
        %1509 = vst.msk [vmem:[%s1508] sm:$0xff] %vm447, %v1504
        %1510 = vst.msk [vmem:[%s1508 + $0x8] sm:$0xff] %vm447, %v1505
        %1511 = vst.msk [vmem:[%s1508 + $0x10] sm:$0xff] %vm447, %v1506
        %1512 = vst.msk [vmem:[%s1508 + $0x18] sm:$0x3] %vm451, %v1507
        %s1513 = smul.u32 5, %s16
        %p1514 = scmp.lt.s32.totalorder %s1513, 9
        %s1515 = scalar_select %p1514, %s1513, 9
        %s1516 = smul.addr %s1515, 4
        %s1517 = smul.addr %s1516, 8
        %s1518 = scalar_lea.vmem %s3, %s1517
        // Predicated region
        $region41: #{tpu_custom_call.1} parent=31 // pred_check
          %p1519 = pneg %p97
        $region42: #{tpu_custom_call.1} parent=31 // pred_check_branch
          %1521 = sbr.rel (%p1519) target = $region44
        $region43: #{tpu_custom_call.1} parent=31 // pred_region
          %s1522 = smul.u32 5, %s16
        $region44: #{tpu_custom_call.1} parent=31 // pred_fallthru
          _
      $region32: #{tpu_custom_call.1} parent=5 // pred_fallthru
        _
      %p1523 = scmp.le.s32.totalorder 2, %s11
      // Predicated region
      $region45: #{tpu_custom_call.1} parent=5 // pred_check
        %p1524 = pneg %p1523
      $region46: #{tpu_custom_call.1} parent=5 // pred_check_branch
        %1526 = sbr.rel (%p1524) target = $region48
      $region47: #{tpu_custom_call.1} parent=5 // pred_region
        %s1527 = ssub.s32 %s11, 2
        // Predicated region
        $region49: #{tpu_custom_call.1} parent=47 // pred_check
          %p1528 = pneg %p103
        $region50: #{tpu_custom_call.1} parent=47 // pred_check_branch
          %1530 = sbr.rel (%p1528) target = $region52
        $region51: #{tpu_custom_call.1} parent=47 // pred_region
          %s1531 = smul.u32 5, %s17
          %p1532 = scmp.lt.s32.totalorder %s1531, 9
          %s1533 = scalar_select %p1532, %s1531, 9
          %s1534 = smul.addr %s1533, 4
          %s1535 = smul.addr %s1534, 8
          %s1536 = scalar_lea.vmem %s3, %s1535
        $region52: #{tpu_custom_call.1} parent=47 // pred_fallthru
          _
      $region48: #{tpu_custom_call.1} parent=5 // pred_fallthru
        _
    $region6: #{tpu_custom_call.1} parent=1 // loop_footer
      %s15 = sadd.s32 1, %s11
    $region7: #{tpu_custom_call.1} parent=1 // loop_footer_branch
      %10 = sbr.rel target = $region3
    $region8: #{tpu_custom_call.1} parent=1 // loop_exit
      _
    %1537 = vsyncpa [#allocation3], 1
    %s1538 = scalar_lea.sflag [#allocation3], 1
    %1539 = vsyncpa %s1538, 1
    %1540 = vsyncpa [#allocation5], 1

</llo_original>
